<compile_context>
chip_gen: v5e
topology: v5e:2x2
jax: 0.10.0
libtpu: 0.0.40
codegen_flags: <defaults>
</compile_context>

<pallas_src>
import jax
import jax.numpy as jnp
from jax import lax
from jax.experimental import pallas as pl
from jax.experimental.pallas import tpu as pltpu

# ----------------------------- config (small) -----------------------------
VOCAB = 128          # len(symbols)
PAD_IDX = 100        # padding_idx of src_word_emb
HIDDEN = 32          # model_config.encoder.n_hidden == decoder.n_hidden
SPK_DIM = 16         # model_config.speaker_embed_dim
LANG_DIM = 8         # model_config.lang_embed_dim
N_SPEAKERS = 4
N_LANGS = 4          # len(SUPPORTED_LANGUAGES)
BOTTLE_U = 16        # reference_encoder.bottleneck_size_u
BOTTLE_P = 8         # reference_encoder.bottleneck_size_p
N_MELS = 24          # preprocess_config.stft.n_mel_channels
B, T = 2, 16


def _layernorm(x, eps=1e-5):
    """LayerNorm over the last dim, elementwise_affine=False."""
    mean = jnp.mean(x, axis=-1, keepdims=True)
    var = jnp.mean(jnp.square(x - mean), axis=-1, keepdims=True)
    return (x - mean) * lax.rsqrt(var + eps)


# ------------------------------- fused kernel ------------------------------
def fused_acoustic_kernel(
        tok_ref, spk_ref, lng_ref, mask_ref,
        word_tbl_ref, spk_tbl_ref, lang_tbl_ref,
        enc_w_ref, enc_b_ref,
        up_w_ref, up_b_ref,
        u_bottle_w_ref, u_bottle_b_ref,
        p_bottle_w_ref, p_bottle_b_ref,
        dec_w_ref, dec_b_ref,
        mel_w_ref, mel_b_ref,
        mel_out_ref, emb_out_ref):
    b = mel_out_ref.shape[0]
    t = mel_out_ref.shape[2]
    bt = tok_ref.shape[0]
    v = word_tbl_ref.shape[0]
    h = word_tbl_ref.shape[1]
    n_u = u_bottle_w_ref.shape[0]

    tok = tok_ref[...]                       # (BT, 1) int32
    spk = spk_ref[...]                       # (BT, 1) int32
    lng = lng_ref[...]                       # (BT, 1) int32
    keep = 1.0 - mask_ref[...]               # (BT, 1) f32; all ones at inference

    # ---- get_embeddings ----------------------------------------------------
    # EmbeddingPadded: padding row already zeroed host-side (pad_mult folded
    # into word_tbl at init).  Vocab gather = one-hot matmul (K=128 -> MXU).
    oh_tok = (tok == lax.broadcasted_iota(jnp.int32, (bt, v), 1)).astype(jnp.float32)
    tok_emb = jnp.dot(oh_tok, word_tbl_ref[...],
                      preferred_element_type=jnp.float32) * keep            # (BT, H)

    # Speaker / language tables are tiny: VPU select-accumulate, no MXU.
    ds = spk_tbl_ref.shape[1]
    dl = lang_tbl_ref.shape[1]
    spk_emb = jnp.zeros((bt, ds), jnp.float32)
    for i in range(spk_tbl_ref.shape[0]):
        spk_emb = spk_emb + (spk == i).astype(jnp.float32) * spk_tbl_ref[i:i + 1, :]
    lang_emb = jnp.zeros((bt, dl), jnp.float32)
    for i in range(lang_tbl_ref.shape[0]):
        lang_emb = lang_emb + (lng == i).astype(jnp.float32) * lang_tbl_ref[i:i + 1, :]

    # F.normalize(emb_g(speaker_idx)) with PyTorch defaults (p=2, dim=1):
    # L2-normalize over the T axis, per batch and per feature.
    rows = []
    for bb in range(b):
        seg = spk_emb[bb * t:(bb + 1) * t, :]                                # (T, Ds)
        inv = lax.rsqrt(jnp.maximum(jnp.sum(seg * seg, axis=0, keepdims=True), 1e-24))
        rows.append(seg * inv)
    spk_emb = jnp.concatenate(rows, axis=0)                                  # (BT, Ds)

    # embeddings = cat([speaker, lang], dim=-1).masked_fill(src_mask, 0)
    emb_out_ref[...] = jnp.concatenate([spk_emb, lang_emb], axis=-1) * keep

    # ---- encoder -----------------------------------------------------------
    # TODO(synk): positional_encoding + Conformer encoder definitions are not
    # provided in the reference; stand-in = single linear projection.
    x = jnp.dot(tok_emb, enc_w_ref[...],
                preferred_element_type=jnp.float32) + enc_b_ref[...]         # (BT, H)

    # ---- prosody predictor heads (fused into one wider matmul) -------------
    # TODO(synk): PhonemeProsodyPredictor (utterance + phoneme level) not
    # provided; stand-ins = linear heads with lane-concatenated weights.
    up = jnp.dot(x, up_w_ref[...],
                 preferred_element_type=jnp.float32) + up_b_ref[...]         # (BT, U+P)
    u_feats = up[:, :n_u]                                                    # (BT, U)
    p_feats = up[:, n_u:]                                                    # (BT, P)

    # u_prosody_pred = u_norm(average_utterance_prosody(u_feats, src_mask))
    u_rows = []
    for bb in range(b):
        seg = u_feats[bb * t:(bb + 1) * t, :]                                # (T, U)
        length = jnp.sum(keep[bb * t:(bb + 1) * t, :], axis=0, keepdims=True)  # (1, 1)
        u_rows.append(jnp.sum(seg, axis=0, keepdims=True)
                      * pl.reciprocal(length, approx=True))
    u_pros = _layernorm(jnp.concatenate(u_rows, axis=0))                     # (B, U)

    # p_prosody_pred = p_norm(p_feats)
    p_pros = _layernorm(p_feats)                                             # (BT, P)

    # x = x + u_bottle_out(u_pros) + p_bottle_out(p_pros)
    u_add = jnp.dot(u_pros, u_bottle_w_ref[...],
                    preferred_element_type=jnp.float32) + u_bottle_b_ref[...]  # (B, H)
    u_add_bt = jnp.concatenate(
        [jnp.broadcast_to(u_add[bb:bb + 1, :], (t, h)) for bb in range(b)], axis=0)
    p_add = jnp.dot(p_pros, p_bottle_w_ref[...],
                    preferred_element_type=jnp.float32) + p_bottle_b_ref[...]  # (BT, H)
    x = x + u_add_bt + p_add

    # TODO(synk): pitch_adaptor_conv / energy_adaptor / DurationAdaptor are
    # not provided in the reference; treated as identity (T_mel == T).

    # ---- decoder + to_mel ----------------------------------------------------
    # TODO(synk): Conformer decoder not provided; stand-in = linear projection.
    dec = jnp.dot(x, dec_w_ref[...],
                  preferred_element_type=jnp.float32) + dec_b_ref[...]       # (BT, H)
    mel = jnp.dot(dec, mel_w_ref[...],
                  preferred_element_type=jnp.float32) + mel_b_ref[...]       # (BT, M)

    # y_pred.permute((0, 2, 1)) done in-kernel: write (B, n_mels, T) directly.
    for bb in range(b):
        mel_out_ref[bb] = jnp.transpose(mel[bb * t:(bb + 1) * t, :])


# ------------------------------ wrapper --------------------------------------
def acoustic_model_forward(params, tokens, speakers, langs, d_control=1.0):
    """Inference forward() of AcousticModel as one fused Pallas call."""
    del d_control  # TODO(synk): DurationAdaptor not provided; d_control unused.
    b, t = tokens.shape
    bt = b * t

    tok = tokens.reshape(bt, 1).astype(jnp.int32)
    spk = speakers.reshape(bt, 1).astype(jnp.int32)
    lng = langs.reshape(bt, 1).astype(jnp.int32)
    # src_mask = get_mask_from_lengths([T]) -> all False at inference.
    src_mask = jnp.zeros((bt, 1), jnp.float32)

    n_mels = params["mel_w"].shape[1]
    emb_dim = params["spk_emb"].shape[1] + params["lang_emb"].shape[1]

    inputs = (tok, spk, lng, src_mask,
              params["word_emb"], params["spk_emb"], params["lang_emb"],
              params["enc_w"], params["enc_b"],
              params["up_w"], params["up_b"],
              params["u_bottle_w"], params["u_bottle_b"],
              params["p_bottle_w"], params["p_bottle_b"],
              params["dec_w"], params["dec_b"],
              params["mel_w"], params["mel_b"])

    vmem = pl.BlockSpec(memory_space=pltpu.MemorySpace.VMEM)
    mel, _embeddings = pl.pallas_call(
        fused_acoustic_kernel,
        out_shape=(jax.ShapeDtypeStruct((b, n_mels, t), jnp.float32),
                   jax.ShapeDtypeStruct((bt, emb_dim), jnp.float32)),
        in_specs=[vmem] * len(inputs),
        out_specs=(vmem, vmem),
    )(*inputs)
    return mel                                                    # (B, n_mels, T)


# ------------------------------- params ---------------------------------------
def init_params(key):
    ks = jax.random.split(key, 20)

    def w(k, shape, scale=0.02):
        return (scale * jax.random.normal(k, shape)).astype(jnp.float32)

    # EmbeddingPadded: fold padding_mult into the word table at init time.
    pad_mult = jnp.ones((VOCAB, 1), jnp.float32).at[PAD_IDX, 0].set(0.0)
    word_emb = w(ks[0], (VOCAB, HIDDEN)) * pad_mult

    # Prosody-predictor stand-in heads share one lane-concatenated weight slab.
    u_pred_w, u_pred_b = w(ks[5], (HIDDEN, BOTTLE_U)), w(ks[6], (1, BOTTLE_U))
    p_pred_w, p_pred_b = w(ks[7], (HIDDEN, BOTTLE_P)), w(ks[8], (1, BOTTLE_P))

    return {
        "word_emb": word_emb,
        "spk_emb": w(ks[1], (N_SPEAKERS, SPK_DIM)),
        "lang_emb": w(ks[2], (N_LANGS, LANG_DIM)),
        "enc_w": w(ks[3], (HIDDEN, HIDDEN)), "enc_b": w(ks[4], (1, HIDDEN)),
        "up_w": jnp.concatenate([u_pred_w, p_pred_w], axis=1),
        "up_b": jnp.concatenate([u_pred_b, p_pred_b], axis=1),
        "u_bottle_w": w(ks[9], (BOTTLE_U, HIDDEN)), "u_bottle_b": w(ks[10], (1, HIDDEN)),
        "p_bottle_w": w(ks[11], (BOTTLE_P, HIDDEN)), "p_bottle_b": w(ks[12], (1, HIDDEN)),
        "dec_w": w(ks[13], (HIDDEN, HIDDEN)), "dec_b": w(ks[14], (1, HIDDEN)),
        "mel_w": w(ks[15], (HIDDEN, N_MELS)), "mel_b": w(ks[16], (1, N_MELS)),
    }


if __name__ == "__main__":
    key = jax.random.PRNGKey(0)
    k_p, k_tok, k_spk, k_lng = jax.random.split(key, 4)
    params = init_params(k_p)

    tokens = jax.random.randint(k_tok, (B, T), 0, VOCAB, dtype=jnp.int32)
    # include a padding token to exercise EmbeddingPadded's zeroed row
    tokens = tokens.at[0, 3].set(PAD_IDX)
    speakers = jax.random.randint(k_spk, (B, T), 0, N_SPEAKERS, dtype=jnp.int32)
    langs = jax.random.randint(k_lng, (B, T), 0, N_LANGS, dtype=jnp.int32)

    fwd = jax.jit(acoustic_model_forward)
    y = fwd(params, tokens, speakers, langs)
    jax.block_until_ready(y)
    assert y.shape == (B, N_MELS, T), y.shape
    print("KERNEL_OK")
</pallas_src>

<mosaic_0001>
module attributes {stable_mosaic.version = 11 : i64} {
  func.func @fused_acoustic_kernel(%arg0: memref<32x1xi32, #tpu.memory_space<vmem>>, %arg1: memref<32x1xi32, #tpu.memory_space<vmem>>, %arg2: memref<32x1xi32, #tpu.memory_space<vmem>>, %arg3: memref<32x1xf32, #tpu.memory_space<vmem>>, %arg4: memref<128x32xf32, #tpu.memory_space<vmem>>, %arg5: memref<4x16xf32, #tpu.memory_space<vmem>>, %arg6: memref<4x8xf32, #tpu.memory_space<vmem>>, %arg7: memref<32x32xf32, #tpu.memory_space<vmem>>, %arg8: memref<1x32xf32, #tpu.memory_space<vmem>>, %arg9: memref<32x24xf32, #tpu.memory_space<vmem>>, %arg10: memref<1x24xf32, #tpu.memory_space<vmem>>, %arg11: memref<16x32xf32, #tpu.memory_space<vmem>>, %arg12: memref<1x32xf32, #tpu.memory_space<vmem>>, %arg13: memref<8x32xf32, #tpu.memory_space<vmem>>, %arg14: memref<1x32xf32, #tpu.memory_space<vmem>>, %arg15: memref<32x32xf32, #tpu.memory_space<vmem>>, %arg16: memref<1x32xf32, #tpu.memory_space<vmem>>, %arg17: memref<32x24xf32, #tpu.memory_space<vmem>>, %arg18: memref<1x24xf32, #tpu.memory_space<vmem>>, %arg19: memref<2x24x16xf32, #tpu.memory_space<vmem>>, %arg20: memref<32x24xf32, #tpu.memory_space<vmem>>) attributes {dimension_semantics = [], scalar_prefetch = 0 : i64, scratch_operands = 0 : i64, tpu.core_type = #tpu.core_type<tc>} {
    %c0 = arith.constant 0 : index
    %c0_0 = arith.constant 0 : index
    %0 = vector.load %arg0[%c0, %c0_0] : memref<32x1xi32, #tpu.memory_space<vmem>>, vector<32x1xi32>
    %c0_1 = arith.constant 0 : index
    %c0_2 = arith.constant 0 : index
    %1 = vector.load %arg1[%c0_1, %c0_2] : memref<32x1xi32, #tpu.memory_space<vmem>>, vector<32x1xi32>
    %c0_3 = arith.constant 0 : index
    %c0_4 = arith.constant 0 : index
    %2 = vector.load %arg2[%c0_3, %c0_4] : memref<32x1xi32, #tpu.memory_space<vmem>>, vector<32x1xi32>
    %c0_5 = arith.constant 0 : index
    %c0_6 = arith.constant 0 : index
    %3 = vector.load %arg3[%c0_5, %c0_6] : memref<32x1xf32, #tpu.memory_space<vmem>>, vector<32x1xf32>
    %cst = arith.constant 1.000000e+00 : f32
    %4 = vector.broadcast %cst : f32 to vector<32x1xf32>
    %5 = arith.subf %4, %3 : vector<32x1xf32>
    %6 = tpu.iota {dimensions = array<i32: 1>} : vector<32x128xi32>
    %7 = vector.broadcast %0 : vector<32x1xi32> to vector<32x128xi32>
    %8 = arith.cmpi eq, %7, %6 : vector<32x128xi32>
    %9 = arith.extui %8 : vector<32x128xi1> to vector<32x128xi32>
    %10 = arith.sitofp %9 : vector<32x128xi32> to vector<32x128xf32>
    %c0_7 = arith.constant 0 : index
    %c0_8 = arith.constant 0 : index
    %11 = vector.load %arg4[%c0_7, %c0_8] : memref<128x32xf32, #tpu.memory_space<vmem>>, vector<128x32xf32>
    %cst_9 = arith.constant dense<0.000000e+00> : vector<32x32xf32>
    %12 = tpu.matmul %10, %11, %cst_9 {dimension_numbers = #tpu.dot_dimension_numbers<[1], [0], [0], [1], [0, 0, 1, 1], [], []>} : vector<32x128xf32>, vector<128x32xf32>, vector<32x32xf32> -> vector<32x32xf32>
    %13 = vector.broadcast %5 : vector<32x1xf32> to vector<32x32xf32>
    %14 = arith.mulf %12, %13 : vector<32x32xf32>
    %cst_10 = arith.constant 0.000000e+00 : f32
    %15 = vector.broadcast %cst_10 : f32 to vector<32x16xf32>
    %c0_i32 = arith.constant 0 : i32
    %16 = vector.broadcast %c0_i32 : i32 to vector<32x1xi32>
    %17 = arith.cmpi eq, %1, %16 : vector<32x1xi32>
    %18 = arith.extui %17 : vector<32x1xi1> to vector<32x1xi32>
    %19 = arith.sitofp %18 : vector<32x1xi32> to vector<32x1xf32>
    %c0_11 = arith.constant 0 : index
    %c0_12 = arith.constant 0 : index
    %20 = vector.load %arg5[%c0_11, %c0_12] : memref<4x16xf32, #tpu.memory_space<vmem>>, vector<1x16xf32>
    %21 = vector.broadcast %19 : vector<32x1xf32> to vector<32x16xf32>
    %22 = vector.broadcast %20 : vector<1x16xf32> to vector<32x16xf32>
    %23 = arith.mulf %21, %22 : vector<32x16xf32>
    %24 = arith.addf %15, %23 : vector<32x16xf32>
    %c1_i32 = arith.constant 1 : i32
    %25 = vector.broadcast %c1_i32 : i32 to vector<32x1xi32>
    %26 = arith.cmpi eq, %1, %25 : vector<32x1xi32>
    %27 = arith.extui %26 : vector<32x1xi1> to vector<32x1xi32>
    %28 = arith.sitofp %27 : vector<32x1xi32> to vector<32x1xf32>
    %c1 = arith.constant 1 : index
    %c0_13 = arith.constant 0 : index
    %29 = vector.load %arg5[%c1, %c0_13] : memref<4x16xf32, #tpu.memory_space<vmem>>, vector<1x16xf32>
    %30 = vector.broadcast %28 : vector<32x1xf32> to vector<32x16xf32>
    %31 = vector.broadcast %29 : vector<1x16xf32> to vector<32x16xf32>
    %32 = arith.mulf %30, %31 : vector<32x16xf32>
    %33 = arith.addf %24, %32 : vector<32x16xf32>
    %c2_i32 = arith.constant 2 : i32
    %34 = vector.broadcast %c2_i32 : i32 to vector<32x1xi32>
    %35 = arith.cmpi eq, %1, %34 : vector<32x1xi32>
    %36 = arith.extui %35 : vector<32x1xi1> to vector<32x1xi32>
    %37 = arith.sitofp %36 : vector<32x1xi32> to vector<32x1xf32>
    %c2 = arith.constant 2 : index
    %c0_14 = arith.constant 0 : index
    %38 = vector.load %arg5[%c2, %c0_14] : memref<4x16xf32, #tpu.memory_space<vmem>>, vector<1x16xf32>
    %39 = vector.broadcast %37 : vector<32x1xf32> to vector<32x16xf32>
    %40 = vector.broadcast %38 : vector<1x16xf32> to vector<32x16xf32>
    %41 = arith.mulf %39, %40 : vector<32x16xf32>
    %42 = arith.addf %33, %41 : vector<32x16xf32>
    %c3_i32 = arith.constant 3 : i32
    %43 = vector.broadcast %c3_i32 : i32 to vector<32x1xi32>
    %44 = arith.cmpi eq, %1, %43 : vector<32x1xi32>
    %45 = arith.extui %44 : vector<32x1xi1> to vector<32x1xi32>
    %46 = arith.sitofp %45 : vector<32x1xi32> to vector<32x1xf32>
    %c3 = arith.constant 3 : index
    %c0_15 = arith.constant 0 : index
    %47 = vector.load %arg5[%c3, %c0_15] : memref<4x16xf32, #tpu.memory_space<vmem>>, vector<1x16xf32>
    %48 = vector.broadcast %46 : vector<32x1xf32> to vector<32x16xf32>
    %49 = vector.broadcast %47 : vector<1x16xf32> to vector<32x16xf32>
    %50 = arith.mulf %48, %49 : vector<32x16xf32>
    %51 = arith.addf %42, %50 : vector<32x16xf32>
    %cst_16 = arith.constant 0.000000e+00 : f32
    %52 = vector.broadcast %cst_16 : f32 to vector<32x8xf32>
    %c0_i32_17 = arith.constant 0 : i32
    %53 = vector.broadcast %c0_i32_17 : i32 to vector<32x1xi32>
    %54 = arith.cmpi eq, %2, %53 : vector<32x1xi32>
    %55 = arith.extui %54 : vector<32x1xi1> to vector<32x1xi32>
    %56 = arith.sitofp %55 : vector<32x1xi32> to vector<32x1xf32>
    %c0_18 = arith.constant 0 : index
    %c0_19 = arith.constant 0 : index
    %57 = vector.load %arg6[%c0_18, %c0_19] : memref<4x8xf32, #tpu.memory_space<vmem>>, vector<1x8xf32>
    %58 = vector.broadcast %56 : vector<32x1xf32> to vector<32x8xf32>
    %59 = vector.broadcast %57 : vector<1x8xf32> to vector<32x8xf32>
    %60 = arith.mulf %58, %59 : vector<32x8xf32>
    %61 = arith.addf %52, %60 : vector<32x8xf32>
    %c1_i32_20 = arith.constant 1 : i32
    %62 = vector.broadcast %c1_i32_20 : i32 to vector<32x1xi32>
    %63 = arith.cmpi eq, %2, %62 : vector<32x1xi32>
    %64 = arith.extui %63 : vector<32x1xi1> to vector<32x1xi32>
    %65 = arith.sitofp %64 : vector<32x1xi32> to vector<32x1xf32>
    %c1_21 = arith.constant 1 : index
    %c0_22 = arith.constant 0 : index
    %66 = vector.load %arg6[%c1_21, %c0_22] : memref<4x8xf32, #tpu.memory_space<vmem>>, vector<1x8xf32>
    %67 = vector.broadcast %65 : vector<32x1xf32> to vector<32x8xf32>
    %68 = vector.broadcast %66 : vector<1x8xf32> to vector<32x8xf32>
    %69 = arith.mulf %67, %68 : vector<32x8xf32>
    %70 = arith.addf %61, %69 : vector<32x8xf32>
    %c2_i32_23 = arith.constant 2 : i32
    %71 = vector.broadcast %c2_i32_23 : i32 to vector<32x1xi32>
    %72 = arith.cmpi eq, %2, %71 : vector<32x1xi32>
    %73 = arith.extui %72 : vector<32x1xi1> to vector<32x1xi32>
    %74 = arith.sitofp %73 : vector<32x1xi32> to vector<32x1xf32>
    %c2_24 = arith.constant 2 : index
    %c0_25 = arith.constant 0 : index
    %75 = vector.load %arg6[%c2_24, %c0_25] : memref<4x8xf32, #tpu.memory_space<vmem>>, vector<1x8xf32>
    %76 = vector.broadcast %74 : vector<32x1xf32> to vector<32x8xf32>
    %77 = vector.broadcast %75 : vector<1x8xf32> to vector<32x8xf32>
    %78 = arith.mulf %76, %77 : vector<32x8xf32>
    %79 = arith.addf %70, %78 : vector<32x8xf32>
    %c3_i32_26 = arith.constant 3 : i32
    %80 = vector.broadcast %c3_i32_26 : i32 to vector<32x1xi32>
    %81 = arith.cmpi eq, %2, %80 : vector<32x1xi32>
    %82 = arith.extui %81 : vector<32x1xi1> to vector<32x1xi32>
    %83 = arith.sitofp %82 : vector<32x1xi32> to vector<32x1xf32>
    %c3_27 = arith.constant 3 : index
    %c0_28 = arith.constant 0 : index
    %84 = vector.load %arg6[%c3_27, %c0_28] : memref<4x8xf32, #tpu.memory_space<vmem>>, vector<1x8xf32>
    %85 = vector.broadcast %83 : vector<32x1xf32> to vector<32x8xf32>
    %86 = vector.broadcast %84 : vector<1x8xf32> to vector<32x8xf32>
    %87 = arith.mulf %85, %86 : vector<32x8xf32>
    %88 = arith.addf %79, %87 : vector<32x8xf32>
    %89 = vector.extract_strided_slice %51 {offsets = [0, 0], sizes = [16, 16], strides = [1, 1]} : vector<32x16xf32> to vector<16x16xf32>
    %90 = arith.mulf %89, %89 : vector<16x16xf32>
    %cst_29 = arith.constant dense<0.000000e+00> : vector<16xf32>
    %91 = vector.multi_reduction <add>, %90, %cst_29 [0] : vector<16x16xf32> to vector<16xf32>
    %92 = vector.shape_cast %91 : vector<16xf32> to vector<1x16xf32>
    %cst_30 = arith.constant 1.000000e-24 : f32
    %93 = vector.broadcast %cst_30 : f32 to vector<1x16xf32>
    %94 = arith.maximumf %92, %93 : vector<1x16xf32>
    %95 = math.rsqrt %94 : vector<1x16xf32>
    %96 = vector.broadcast %95 : vector<1x16xf32> to vector<16x16xf32>
    %97 = arith.mulf %89, %96 : vector<16x16xf32>
    %98 = vector.extract_strided_slice %51 {offsets = [16, 0], sizes = [16, 16], strides = [1, 1]} : vector<32x16xf32> to vector<16x16xf32>
    %99 = arith.mulf %98, %98 : vector<16x16xf32>
    %cst_31 = arith.constant dense<0.000000e+00> : vector<16xf32>
    %100 = vector.multi_reduction <add>, %99, %cst_31 [0] : vector<16x16xf32> to vector<16xf32>
    %101 = vector.shape_cast %100 : vector<16xf32> to vector<1x16xf32>
    %cst_32 = arith.constant 1.000000e-24 : f32
    %102 = vector.broadcast %cst_32 : f32 to vector<1x16xf32>
    %103 = arith.maximumf %101, %102 : vector<1x16xf32>
    %104 = math.rsqrt %103 : vector<1x16xf32>
    %105 = vector.broadcast %104 : vector<1x16xf32> to vector<16x16xf32>
    %106 = arith.mulf %98, %105 : vector<16x16xf32>
    %107 = tpu.concatenate %97, %106 in 0 : vector<16x16xf32>, vector<16x16xf32> -> vector<32x16xf32>
    %108 = tpu.concatenate %107, %88 in 1 : vector<32x16xf32>, vector<32x8xf32> -> vector<32x24xf32>
    %109 = vector.broadcast %5 : vector<32x1xf32> to vector<32x24xf32>
    %110 = arith.mulf %108, %109 : vector<32x24xf32>
    %c0_33 = arith.constant 0 : index
    %c0_34 = arith.constant 0 : index
    %111 = vector.load %arg20[%c0_33, %c0_34] : memref<32x24xf32, #tpu.memory_space<vmem>>, vector<32x24xf32>
    tpu.vector_store %arg20[%c0_33, %c0_34], %110 {strides = array<i32>} : memref<32x24xf32, #tpu.memory_space<vmem>>, vector<32x24xf32>,
    %c0_35 = arith.constant 0 : index
    %c0_36 = arith.constant 0 : index
    %112 = vector.load %arg7[%c0_35, %c0_36] : memref<32x32xf32, #tpu.memory_space<vmem>>, vector<32x32xf32>
    %cst_37 = arith.constant dense<0.000000e+00> : vector<32x32xf32>
    %113 = tpu.matmul %14, %112, %cst_37 {dimension_numbers = #tpu.dot_dimension_numbers<[1], [0], [0], [1], [0, 0, 1, 1], [], []>} : vector<32x32xf32>, vector<32x32xf32>, vector<32x32xf32> -> vector<32x32xf32>
    %c0_38 = arith.constant 0 : index
    %c0_39 = arith.constant 0 : index
    %114 = vector.load %arg8[%c0_38, %c0_39] : memref<1x32xf32, #tpu.memory_space<vmem>>, vector<1x32xf32>
    %115 = vector.broadcast %114 : vector<1x32xf32> to vector<32x32xf32>
    %116 = arith.addf %113, %115 : vector<32x32xf32>
    %c0_40 = arith.constant 0 : index
    %c0_41 = arith.constant 0 : index
    %117 = vector.load %arg9[%c0_40, %c0_41] : memref<32x24xf32, #tpu.memory_space<vmem>>, vector<32x24xf32>
    %cst_42 = arith.constant dense<0.000000e+00> : vector<32x24xf32>
    %118 = tpu.matmul %116, %117, %cst_42 {dimension_numbers = #tpu.dot_dimension_numbers<[1], [0], [0], [1], [0, 0, 1, 1], [], []>} : vector<32x32xf32>, vector<32x24xf32>, vector<32x24xf32> -> vector<32x24xf32>
    %c0_43 = arith.constant 0 : index
    %c0_44 = arith.constant 0 : index
    %119 = vector.load %arg10[%c0_43, %c0_44] : memref<1x24xf32, #tpu.memory_space<vmem>>, vector<1x24xf32>
    %120 = vector.broadcast %119 : vector<1x24xf32> to vector<32x24xf32>
    %121 = arith.addf %118, %120 : vector<32x24xf32>
    %122 = vector.extract_strided_slice %121 {offsets = [0, 0], sizes = [32, 16], strides = [1, 1]} : vector<32x24xf32> to vector<32x16xf32>
    %123 = vector.extract_strided_slice %121 {offsets = [0, 16], sizes = [32, 8], strides = [1, 1]} : vector<32x24xf32> to vector<32x8xf32>
    %124 = vector.extract_strided_slice %122 {offsets = [0, 0], sizes = [16, 16], strides = [1, 1]} : vector<32x16xf32> to vector<16x16xf32>
    %125 = vector.extract_strided_slice %5 {offsets = [0, 0], sizes = [16, 1], strides = [1, 1]} : vector<32x1xf32> to vector<16x1xf32>
    %cst_45 = arith.constant dense<0.000000e+00> : vector<1xf32>
    %126 = vector.multi_reduction <add>, %125, %cst_45 [0] : vector<16x1xf32> to vector<1xf32>
    %127 = vector.shape_cast %126 : vector<1xf32> to vector<1x1xf32>
    %cst_46 = arith.constant dense<0.000000e+00> : vector<16xf32>
    %128 = vector.multi_reduction <add>, %124, %cst_46 [0] : vector<16x16xf32> to vector<16xf32>
    %129 = vector.shape_cast %128 : vector<16xf32> to vector<1x16xf32>
    %130 = tpu.reciprocal %127 {approx = true} : vector<1x1xf32> -> vector<1x1xf32>
    %131 = vector.broadcast %130 : vector<1x1xf32> to vector<1x16xf32>
    %132 = arith.mulf %129, %131 : vector<1x16xf32>
    %133 = vector.extract_strided_slice %122 {offsets = [16, 0], sizes = [16, 16], strides = [1, 1]} : vector<32x16xf32> to vector<16x16xf32>
    %134 = vector.extract_strided_slice %5 {offsets = [16, 0], sizes = [16, 1], strides = [1, 1]} : vector<32x1xf32> to vector<16x1xf32>
    %cst_47 = arith.constant dense<0.000000e+00> : vector<1xf32>
    %135 = vector.multi_reduction <add>, %134, %cst_47 [0] : vector<16x1xf32> to vector<1xf32>
    %136 = vector.shape_cast %135 : vector<1xf32> to vector<1x1xf32>
    %cst_48 = arith.constant dense<0.000000e+00> : vector<16xf32>
    %137 = vector.multi_reduction <add>, %133, %cst_48 [0] : vector<16x16xf32> to vector<16xf32>
    %138 = vector.shape_cast %137 : vector<16xf32> to vector<1x16xf32>
    %139 = tpu.reciprocal %136 {approx = true} : vector<1x1xf32> -> vector<1x1xf32>
    %140 = vector.broadcast %139 : vector<1x1xf32> to vector<1x16xf32>
    %141 = arith.mulf %138, %140 : vector<1x16xf32>
    %142 = tpu.concatenate %132, %141 in 0 : vector<1x16xf32>, vector<1x16xf32> -> vector<2x16xf32>
    %cst_49 = arith.constant dense<0.000000e+00> : vector<2xf32>
    %143 = vector.multi_reduction <add>, %142, %cst_49 [1] : vector<2x16xf32> to vector<2xf32>
    %144 = vector.shape_cast %143 : vector<2xf32> to vector<2x1xf32>
    %cst_50 = arith.constant 1.600000e+01 : f32
    %145 = vector.broadcast %cst_50 : f32 to vector<2x1xf32>
    %146 = arith.divf %144, %145 : vector<2x1xf32>
    %147 = vector.broadcast %146 : vector<2x1xf32> to vector<2x16xf32>
    %148 = arith.subf %142, %147 : vector<2x16xf32>
    %149 = arith.mulf %148, %148 : vector<2x16xf32>
    %cst_51 = arith.constant dense<0.000000e+00> : vector<2xf32>
    %150 = vector.multi_reduction <add>, %149, %cst_51 [1] : vector<2x16xf32> to vector<2xf32>
    %151 = vector.shape_cast %150 : vector<2xf32> to vector<2x1xf32>
    %cst_52 = arith.constant 1.600000e+01 : f32
    %152 = vector.broadcast %cst_52 : f32 to vector<2x1xf32>
    %153 = arith.divf %151, %152 : vector<2x1xf32>
    %154 = vector.broadcast %146 : vector<2x1xf32> to vector<2x16xf32>
    %155 = arith.subf %142, %154 : vector<2x16xf32>
    %cst_53 = arith.constant 9.99999974E-6 : f32
    %156 = vector.broadcast %cst_53 : f32 to vector<2x1xf32>
    %157 = arith.addf %153, %156 : vector<2x1xf32>
    %158 = math.rsqrt %157 : vector<2x1xf32>
    %159 = vector.broadcast %158 : vector<2x1xf32> to vector<2x16xf32>
    %160 = arith.mulf %155, %159 : vector<2x16xf32>
    %cst_54 = arith.constant dense<0.000000e+00> : vector<32xf32>
    %161 = vector.multi_reduction <add>, %123, %cst_54 [1] : vector<32x8xf32> to vector<32xf32>
    %162 = vector.shape_cast %161 : vector<32xf32> to vector<32x1xf32>
    %cst_55 = arith.constant 8.000000e+00 : f32
    %163 = vector.broadcast %cst_55 : f32 to vector<32x1xf32>
    %164 = arith.divf %162, %163 : vector<32x1xf32>
    %165 = vector.broadcast %164 : vector<32x1xf32> to vector<32x8xf32>
    %166 = arith.subf %123, %165 : vector<32x8xf32>
    %167 = arith.mulf %166, %166 : vector<32x8xf32>
    %cst_56 = arith.constant dense<0.000000e+00> : vector<32xf32>
    %168 = vector.multi_reduction <add>, %167, %cst_56 [1] : vector<32x8xf32> to vector<32xf32>
    %169 = vector.shape_cast %168 : vector<32xf32> to vector<32x1xf32>
    %cst_57 = arith.constant 8.000000e+00 : f32
    %170 = vector.broadcast %cst_57 : f32 to vector<32x1xf32>
    %171 = arith.divf %169, %170 : vector<32x1xf32>
    %172 = vector.broadcast %164 : vector<32x1xf32> to vector<32x8xf32>
    %173 = arith.subf %123, %172 : vector<32x8xf32>
    %cst_58 = arith.constant 9.99999974E-6 : f32
    %174 = vector.broadcast %cst_58 : f32 to vector<32x1xf32>
    %175 = arith.addf %171, %174 : vector<32x1xf32>
    %176 = math.rsqrt %175 : vector<32x1xf32>
    %177 = vector.broadcast %176 : vector<32x1xf32> to vector<32x8xf32>
    %178 = arith.mulf %173, %177 : vector<32x8xf32>
    %c0_59 = arith.constant 0 : index
    %c0_60 = arith.constant 0 : index
    %179 = vector.load %arg11[%c0_59, %c0_60] : memref<16x32xf32, #tpu.memory_space<vmem>>, vector<16x32xf32>
    %cst_61 = arith.constant dense<0.000000e+00> : vector<2x32xf32>
    %180 = tpu.matmul %160, %179, %cst_61 {dimension_numbers = #tpu.dot_dimension_numbers<[1], [0], [0], [1], [0, 0, 1, 1], [], []>} : vector<2x16xf32>, vector<16x32xf32>, vector<2x32xf32> -> vector<2x32xf32>
    %c0_62 = arith.constant 0 : index
    %c0_63 = arith.constant 0 : index
    %181 = vector.load %arg12[%c0_62, %c0_63] : memref<1x32xf32, #tpu.memory_space<vmem>>, vector<1x32xf32>
    %182 = vector.broadcast %181 : vector<1x32xf32> to vector<2x32xf32>
    %183 = arith.addf %180, %182 : vector<2x32xf32>
    %184 = vector.extract_strided_slice %183 {offsets = [0, 0], sizes = [1, 32], strides = [1, 1]} : vector<2x32xf32> to vector<1x32xf32>
    %185 = vector.shape_cast %184 : vector<1x32xf32> to vector<1x32xf32>
    %186 = vector.broadcast %185 : vector<1x32xf32> to vector<16x32xf32>
    %187 = vector.extract_strided_slice %183 {offsets = [1, 0], sizes = [1, 32], strides = [1, 1]} : vector<2x32xf32> to vector<1x32xf32>
    %188 = vector.shape_cast %187 : vector<1x32xf32> to vector<1x32xf32>
    %189 = vector.broadcast %188 : vector<1x32xf32> to vector<16x32xf32>
    %190 = tpu.concatenate %186, %189 in 0 : vector<16x32xf32>, vector<16x32xf32> -> vector<32x32xf32>
    %c0_64 = arith.constant 0 : index
    %c0_65 = arith.constant 0 : index
    %191 = vector.load %arg13[%c0_64, %c0_65] : memref<8x32xf32, #tpu.memory_space<vmem>>, vector<8x32xf32>
    %cst_66 = arith.constant dense<0.000000e+00> : vector<32x32xf32>
    %192 = tpu.matmul %178, %191, %cst_66 {dimension_numbers = #tpu.dot_dimension_numbers<[1], [0], [0], [1], [0, 0, 1, 1], [], []>} : vector<32x8xf32>, vector<8x32xf32>, vector<32x32xf32> -> vector<32x32xf32>
    %c0_67 = arith.constant 0 : index
    %c0_68 = arith.constant 0 : index
    %193 = vector.load %arg14[%c0_67, %c0_68] : memref<1x32xf32, #tpu.memory_space<vmem>>, vector<1x32xf32>
    %194 = vector.broadcast %193 : vector<1x32xf32> to vector<32x32xf32>
    %195 = arith.addf %192, %194 : vector<32x32xf32>
    %196 = arith.addf %116, %190 : vector<32x32xf32>
    %197 = arith.addf %196, %195 : vector<32x32xf32>
    %c0_69 = arith.constant 0 : index
    %c0_70 = arith.constant 0 : index
    %198 = vector.load %arg15[%c0_69, %c0_70] : memref<32x32xf32, #tpu.memory_space<vmem>>, vector<32x32xf32>
    %cst_71 = arith.constant dense<0.000000e+00> : vector<32x32xf32>
    %199 = tpu.matmul %197, %198, %cst_71 {dimension_numbers = #tpu.dot_dimension_numbers<[1], [0], [0], [1], [0, 0, 1, 1], [], []>} : vector<32x32xf32>, vector<32x32xf32>, vector<32x32xf32> -> vector<32x32xf32>
    %c0_72 = arith.constant 0 : index
    %c0_73 = arith.constant 0 : index
    %200 = vector.load %arg16[%c0_72, %c0_73] : memref<1x32xf32, #tpu.memory_space<vmem>>, vector<1x32xf32>
    %201 = vector.broadcast %200 : vector<1x32xf32> to vector<32x32xf32>
    %202 = arith.addf %199, %201 : vector<32x32xf32>
    %c0_74 = arith.constant 0 : index
    %c0_75 = arith.constant 0 : index
    %203 = vector.load %arg17[%c0_74, %c0_75] : memref<32x24xf32, #tpu.memory_space<vmem>>, vector<32x24xf32>
    %cst_76 = arith.constant dense<0.000000e+00> : vector<32x24xf32>
    %204 = tpu.matmul %202, %203, %cst_76 {dimension_numbers = #tpu.dot_dimension_numbers<[1], [0], [0], [1], [0, 0, 1, 1], [], []>} : vector<32x32xf32>, vector<32x24xf32>, vector<32x24xf32> -> vector<32x24xf32>
    %c0_77 = arith.constant 0 : index
    %c0_78 = arith.constant 0 : index
    %205 = vector.load %arg18[%c0_77, %c0_78] : memref<1x24xf32, #tpu.memory_space<vmem>>, vector<1x24xf32>
    %206 = vector.broadcast %205 : vector<1x24xf32> to vector<32x24xf32>
    %207 = arith.addf %204, %206 : vector<32x24xf32>
    %208 = vector.extract_strided_slice %207 {offsets = [0, 0], sizes = [16, 24], strides = [1, 1]} : vector<32x24xf32> to vector<16x24xf32>
    %209 = tpu.transpose %208, [1, 0] : vector<16x24xf32> -> vector<24x16xf32>
    %c0_79 = arith.constant 0 : index
    %c0_80 = arith.constant 0 : index
    %c0_81 = arith.constant 0 : index
    %210 = vector.load %arg19[%c0_79, %c0_80, %c0_81] : memref<2x24x16xf32, #tpu.memory_space<vmem>>, vector<1x24x16xf32>
    %211 = vector.shape_cast %210 : vector<1x24x16xf32> to vector<24x16xf32>
    %212 = vector.shape_cast %209 : vector<24x16xf32> to vector<1x24x16xf32>
    tpu.vector_store %arg19[%c0_79, %c0_80, %c0_81], %212 {strides = array<i32>} : memref<2x24x16xf32, #tpu.memory_space<vmem>>, vector<1x24x16xf32>,
    %213 = vector.extract_strided_slice %207 {offsets = [16, 0], sizes = [16, 24], strides = [1, 1]} : vector<32x24xf32> to vector<16x24xf32>
    %214 = tpu.transpose %213, [1, 0] : vector<16x24xf32> -> vector<24x16xf32>
    %c1_82 = arith.constant 1 : index
    %c0_83 = arith.constant 0 : index
    %c0_84 = arith.constant 0 : index
    %215 = vector.load %arg19[%c1_82, %c0_83, %c0_84] : memref<2x24x16xf32, #tpu.memory_space<vmem>>, vector<1x24x16xf32>
    %216 = vector.shape_cast %215 : vector<1x24x16xf32> to vector<24x16xf32>
    %217 = vector.shape_cast %214 : vector<24x16xf32> to vector<1x24x16xf32>
    tpu.vector_store %arg19[%c1_82, %c0_83, %c0_84], %217 {strides = array<i32>} : memref<2x24x16xf32, #tpu.memory_space<vmem>>, vector<1x24x16xf32>,
    return
  }
}

</mosaic_0001>

<llo_original>
// kernel: acoustic_model_forward.1
$region0: #{acoustic_model_forward.1}
  #allocation0 [shape = 'u32[]', space=smem, size = 0x4, offset = 0x4, fixed_abs, tag = 'smem constant byte address 0x4 - core index']
  #allocation1 [shape = 'u32[72,128]{1,0:T(1,128)}', space=vmem, size = 0x9000, scoped, tag = 'internal scratch']
  %s0 = inlined_call_operand.vmem [shape: s32[32,1], index: 0, kind: input, shape index: {}]
  %s1 = inlined_call_operand.vmem [shape: s32[32,1], index: 1, kind: input, shape index: {}]
  %s2 = inlined_call_operand.vmem [shape: s32[32,1], index: 2, kind: input, shape index: {}]
  %s3 = inlined_call_operand.vmem [shape: f32[32,1], index: 3, kind: input, shape index: {}]
  %s4 = inlined_call_operand.vmem [shape: f32[128,32], index: 4, kind: input, shape index: {}]
  %s5 = inlined_call_operand.vmem [shape: f32[4,16], index: 5, kind: input, shape index: {}]
  %s6 = inlined_call_operand.vmem [shape: f32[4,8], index: 6, kind: input, shape index: {}]
  %s7 = inlined_call_operand.vmem [shape: f32[32,32], index: 7, kind: input, shape index: {}]
  %s8 = inlined_call_operand.vmem [shape: f32[1,32], index: 8, kind: input, shape index: {}]
  %s9 = inlined_call_operand.vmem [shape: f32[32,24], index: 9, kind: input, shape index: {}]
  %s10 = inlined_call_operand.vmem [shape: f32[1,24], index: 10, kind: input, shape index: {}]
  %s11 = inlined_call_operand.vmem [shape: f32[16,32], index: 11, kind: input, shape index: {}]
  %s12 = inlined_call_operand.vmem [shape: f32[1,32], index: 12, kind: input, shape index: {}]
  %s13 = inlined_call_operand.vmem [shape: f32[8,32], index: 13, kind: input, shape index: {}]
  %s14 = inlined_call_operand.vmem [shape: f32[1,32], index: 14, kind: input, shape index: {}]
  %s15 = inlined_call_operand.vmem [shape: f32[32,32], index: 15, kind: input, shape index: {}]
  %s16 = inlined_call_operand.vmem [shape: f32[1,32], index: 16, kind: input, shape index: {}]
  %s17 = inlined_call_operand.vmem [shape: f32[32,24], index: 17, kind: input, shape index: {}]
  %s18 = inlined_call_operand.vmem [shape: f32[1,24], index: 18, kind: input, shape index: {}]
  %s19 = inlined_call_operand.vmem [shape: f32[2,24,16], index: 19, kind: output, shape index: {0}]
  %s20 = inlined_call_operand.hbm [shape: f32[32,24], index: 20, kind: output, shape index: {1}]
  %21 = xla_tuple %s19, %s20
  %s22 = sld [smem:[#allocation0]]
  $region94: #{acoustic_model_forward.1} parent=0
    _
  %s24 = ssub.s32 1, %s22
  %s25 = scalar_select 0, %s24, %s22
  $region1: #{acoustic_model_forward.1} parent=0
    #allocation2 [shape = 'u8[16384]{0}', space=vmem, size = 0x4000, scoped, tag = 'output window, operand 1, single buffered']
    #allocation3 [shape = 's32[1]{0}', space=sflag, size = 0x4, scoped, tag = 'scoped memory for acoustic_model_forward.1']
    %26 = vsyncpa [#allocation3], 0
    // Predicated region
    $region2: #{acoustic_model_forward.1} parent=1 // pred_check
      _
    $region3: #{acoustic_model_forward.1} parent=1 // pred_check_branch
      %28 = sbr.rel (0) target = $region5
    $region4: #{acoustic_model_forward.1} parent=1 // pred_region
      _
    $region5: #{acoustic_model_forward.1} parent=1 // pred_fallthru
      _
    // Predicated region
    $region6: #{acoustic_model_forward.1} parent=1 // pred_check
      _
    $region7: #{acoustic_model_forward.1} parent=1 // pred_check_branch
      %30 = sbr.rel (0) target = $region9
    $region8: #{acoustic_model_forward.1} parent=1 // pred_region
      _
    $region9: #{acoustic_model_forward.1} parent=1 // pred_fallthru
      _
    // Predicated region
    $region10: #{acoustic_model_forward.1} parent=1 // pred_check
      _
    $region11: #{acoustic_model_forward.1} parent=1 // pred_check_branch
      %32 = sbr.rel (0) target = $region13
    $region12: #{acoustic_model_forward.1} parent=1 // pred_region
      _
    $region13: #{acoustic_model_forward.1} parent=1 // pred_fallthru
      _
    // Predicated region
    $region14: #{acoustic_model_forward.1} parent=1 // pred_check
      _
    $region15: #{acoustic_model_forward.1} parent=1 // pred_check_branch
      %34 = sbr.rel (0) target = $region17
    $region16: #{acoustic_model_forward.1} parent=1 // pred_region
      _
    $region17: #{acoustic_model_forward.1} parent=1 // pred_fallthru
      _
    // Predicated region
    $region18: #{acoustic_model_forward.1} parent=1 // pred_check
      _
    $region19: #{acoustic_model_forward.1} parent=1 // pred_check_branch
      %36 = sbr.rel (0) target = $region21
    $region20: #{acoustic_model_forward.1} parent=1 // pred_region
      _
    $region21: #{acoustic_model_forward.1} parent=1 // pred_fallthru
      _
    // Predicated region
    $region22: #{acoustic_model_forward.1} parent=1 // pred_check
      _
    $region23: #{acoustic_model_forward.1} parent=1 // pred_check_branch
      %38 = sbr.rel (0) target = $region25
    $region24: #{acoustic_model_forward.1} parent=1 // pred_region
      _
    $region25: #{acoustic_model_forward.1} parent=1 // pred_fallthru
      _
    // Predicated region
    $region26: #{acoustic_model_forward.1} parent=1 // pred_check
      _
    $region27: #{acoustic_model_forward.1} parent=1 // pred_check_branch
      %40 = sbr.rel (0) target = $region29
    $region28: #{acoustic_model_forward.1} parent=1 // pred_region
      _
    $region29: #{acoustic_model_forward.1} parent=1 // pred_fallthru
      _
    // Predicated region
    $region30: #{acoustic_model_forward.1} parent=1 // pred_check
      _
    $region31: #{acoustic_model_forward.1} parent=1 // pred_check_branch
      %42 = sbr.rel (0) target = $region33
    $region32: #{acoustic_model_forward.1} parent=1 // pred_region
      _
    $region33: #{acoustic_model_forward.1} parent=1 // pred_fallthru
      _
    // Predicated region
    $region34: #{acoustic_model_forward.1} parent=1 // pred_check
      _
    $region35: #{acoustic_model_forward.1} parent=1 // pred_check_branch
      %44 = sbr.rel (0) target = $region37
    $region36: #{acoustic_model_forward.1} parent=1 // pred_region
      _
    $region37: #{acoustic_model_forward.1} parent=1 // pred_fallthru
      _
    // Predicated region
    $region38: #{acoustic_model_forward.1} parent=1 // pred_check
      _
    $region39: #{acoustic_model_forward.1} parent=1 // pred_check_branch
      %46 = sbr.rel (0) target = $region41
    $region40: #{acoustic_model_forward.1} parent=1 // pred_region
      _
    $region41: #{acoustic_model_forward.1} parent=1 // pred_fallthru
      _
    // Predicated region
    $region42: #{acoustic_model_forward.1} parent=1 // pred_check
      _
    $region43: #{acoustic_model_forward.1} parent=1 // pred_check_branch
      %48 = sbr.rel (0) target = $region45
    $region44: #{acoustic_model_forward.1} parent=1 // pred_region
      _
    $region45: #{acoustic_model_forward.1} parent=1 // pred_fallthru
      _
    // Predicated region
    $region46: #{acoustic_model_forward.1} parent=1 // pred_check
      _
    $region47: #{acoustic_model_forward.1} parent=1 // pred_check_branch
      %50 = sbr.rel (0) target = $region49
    $region48: #{acoustic_model_forward.1} parent=1 // pred_region
      _
    $region49: #{acoustic_model_forward.1} parent=1 // pred_fallthru
      _
    // Predicated region
    $region50: #{acoustic_model_forward.1} parent=1 // pred_check
      _
    $region51: #{acoustic_model_forward.1} parent=1 // pred_check_branch
      %52 = sbr.rel (0) target = $region53
    $region52: #{acoustic_model_forward.1} parent=1 // pred_region
      _
    $region53: #{acoustic_model_forward.1} parent=1 // pred_fallthru
      _
    // Predicated region
    $region54: #{acoustic_model_forward.1} parent=1 // pred_check
      _
    $region55: #{acoustic_model_forward.1} parent=1 // pred_check_branch
      %54 = sbr.rel (0) target = $region57
    $region56: #{acoustic_model_forward.1} parent=1 // pred_region
      _
    $region57: #{acoustic_model_forward.1} parent=1 // pred_fallthru
      _
    // Predicated region
    $region58: #{acoustic_model_forward.1} parent=1 // pred_check
      _
    $region59: #{acoustic_model_forward.1} parent=1 // pred_check_branch
      %56 = sbr.rel (0) target = $region61
    $region60: #{acoustic_model_forward.1} parent=1 // pred_region
      _
    $region61: #{acoustic_model_forward.1} parent=1 // pred_fallthru
      _
    // Predicated region
    $region62: #{acoustic_model_forward.1} parent=1 // pred_check
      _
    $region63: #{acoustic_model_forward.1} parent=1 // pred_check_branch
      %58 = sbr.rel (0) target = $region65
    $region64: #{acoustic_model_forward.1} parent=1 // pred_region
      _
    $region65: #{acoustic_model_forward.1} parent=1 // pred_fallthru
      _
    // Predicated region
    $region66: #{acoustic_model_forward.1} parent=1 // pred_check
      _
    $region67: #{acoustic_model_forward.1} parent=1 // pred_check_branch
      %60 = sbr.rel (0) target = $region69
    $region68: #{acoustic_model_forward.1} parent=1 // pred_region
      _
    $region69: #{acoustic_model_forward.1} parent=1 // pred_fallthru
      _
    // Predicated region
    $region70: #{acoustic_model_forward.1} parent=1 // pred_check
      _
    $region71: #{acoustic_model_forward.1} parent=1 // pred_check_branch
      %62 = sbr.rel (0) target = $region73
    $region72: #{acoustic_model_forward.1} parent=1 // pred_region
      _
    $region73: #{acoustic_model_forward.1} parent=1 // pred_fallthru
      _
    // Predicated region
    $region74: #{acoustic_model_forward.1} parent=1 // pred_check
      _
    $region75: #{acoustic_model_forward.1} parent=1 // pred_check_branch
      %64 = sbr.rel (0) target = $region77
    $region76: #{acoustic_model_forward.1} parent=1 // pred_region
      _
    $region77: #{acoustic_model_forward.1} parent=1 // pred_fallthru
      _
    %v65 = vld [vmem:[%s0] sm:$0xff]
    %v66 = vld [vmem:[%s0 + $0x8] sm:$0xff]
    %v67 = vld [vmem:[%s0 + $0x10] sm:$0xff]
    %v68 = vld [vmem:[%s0 + $0x18] sm:$0xff]
    %v69 = vld [vmem:[%s1] sm:$0xff]
    %v70 = vld [vmem:[%s1 + $0x8] sm:$0xff]
    %v71 = vld [vmem:[%s1 + $0x10] sm:$0xff]
    %v72 = vld [vmem:[%s1 + $0x18] sm:$0xff]
    %v73 = vld [vmem:[%s2] sm:$0xff]
    %v74 = vld [vmem:[%s2 + $0x8] sm:$0xff]
    %v75 = vld [vmem:[%s2 + $0x10] sm:$0xff]
    %v76 = vld [vmem:[%s2 + $0x18] sm:$0xff]
    %v77 = vld [vmem:[%s3] sm:$0xff]
    %v78 = vld [vmem:[%s3 + $0x8] sm:$0xff]
    %v79 = vld [vmem:[%s3 + $0x10] sm:$0xff]
    %v80 = vld [vmem:[%s3 + $0x18] sm:$0xff]
    %v81 = vsub.f32 1.0, %v77
    %v82 = vsub.f32 1.0, %v78
    %v83 = vsub.f32 1.0, %v79
    %v84 = vsub.f32 1.0, %v80
    %v85 = vlaneseq
    %v86 = vand.u32 %v85, 127
    %87 = vset.pattern.permute.xlu0 0
    %88 = vperm.xlu0 %87, %v65
    %v89 = vpop.permute.xlu0 %88
    %90 = vset.pattern.permute.xlu0 0
    %91 = vperm.xlu0 %90, %v66
    %v92 = vpop.permute.xlu0 %91
    %93 = vset.pattern.permute.xlu0 0
    %94 = vperm.xlu0 %93, %v67
    %v95 = vpop.permute.xlu0 %94
    %96 = vset.pattern.permute.xlu0 0
    %97 = vperm.xlu0 %96, %v68
    %v98 = vpop.permute.xlu0 %97
    %vm99 = vcmp.eq.s32.totalorder %v89, %v86
    %vm100 = vcmp.eq.s32.totalorder %v92, %v86
    %vm101 = vcmp.eq.s32.totalorder %v95, %v86
    %vm102 = vcmp.eq.s32.totalorder %v98, %v86
    %v103 = vsel %vm99, 1, 0
    %v104 = vsel %vm100, 1, 0
    %v105 = vsel %vm101, 1, 0
    %v106 = vsel %vm102, 1, 0
    %v107 = vcvt.s32.f32 %v103
    %v108 = vcvt.s32.f32 %v104
    %v109 = vcvt.s32.f32 %v105
    %v110 = vcvt.s32.f32 %v106
    %v111 = vld [vmem:[%s4] sm:$0xff]
    %v112 = vld [vmem:[%s4 + $0x8] sm:$0xff]
    %v113 = vld [vmem:[%s4 + $0x10] sm:$0xff]
    %v114 = vld [vmem:[%s4 + $0x18] sm:$0xff]
    %v115 = vld [vmem:[%s4 + $0x20] sm:$0xff]
    %v116 = vld [vmem:[%s4 + $0x28] sm:$0xff]
    %v117 = vld [vmem:[%s4 + $0x30] sm:$0xff]
    %v118 = vld [vmem:[%s4 + $0x38] sm:$0xff]
    %v119 = vld [vmem:[%s4 + $0x40] sm:$0xff]
    %v120 = vld [vmem:[%s4 + $0x48] sm:$0xff]
    %v121 = vld [vmem:[%s4 + $0x50] sm:$0xff]
    %v122 = vld [vmem:[%s4 + $0x58] sm:$0xff]
    %v123 = vld [vmem:[%s4 + $0x60] sm:$0xff]
    %v124 = vld [vmem:[%s4 + $0x68] sm:$0xff]
    %v125 = vld [vmem:[%s4 + $0x70] sm:$0xff]
    %v126 = vld [vmem:[%s4 + $0x78] sm:$0xff]
    %127 = vmatpush.msra.mxu0 %v126
    %128 = vmatpush.msra.mxu0 %v125
    %129 = vmatpush.msra.mxu0 %v124
    %130 = vmatpush.msra.mxu0 %v123
    %131 = vmatpush.msra.mxu0 %v122
    %132 = vmatpush.msra.mxu0 %v121
    %133 = vmatpush.msra.mxu0 %v120
    %134 = vmatpush.msra.mxu0 %v119
    %135 = vmatpush.msra.mxu0 %v118
    %136 = vmatpush.msra.mxu0 %v117
    %137 = vmatpush.msra.mxu0 %v116
    %138 = vmatpush.msra.mxu0 %v115
    %139 = vmatpush.msra.mxu0 %v114
    %140 = vmatpush.msra.mxu0 %v113
    %141 = vmatpush.msra.mxu0 %v112
    %142 = vmatpush.msra.mxu0 %v111
    %143 = vmatmul.f32.gmra.mxu0 %v107
    %v144 = vpop.f32.mrf.mxu0
    %v145 = vadd.f32 0.0, %v144
    %146 = vmatmul.f32.gmra.mxu0 %v108
    %v147 = vpop.f32.mrf.mxu0
    %v148 = vadd.f32 0.0, %v147
    %149 = vmatmul.f32.gmra.mxu0 %v109
    %v150 = vpop.f32.mrf.mxu0
    %v151 = vadd.f32 0.0, %v150
    %152 = vmatmul.f32.gmra.mxu0 %v110
    %v153 = vpop.f32.mrf.mxu0
    %v154 = vadd.f32 0.0, %v153
    %155 = vdwg.mxu0
    %157 = vset.pattern.permute.xlu0 0
    %158 = vperm.xlu0 %157, %v81
    %v159 = vpop.permute.xlu0 %158
    %162 = vset.pattern.permute.xlu0 0
    %163 = vperm.xlu0 %162, %v82
    %v164 = vpop.permute.xlu0 %163
    %167 = vset.pattern.permute.xlu0 0
    %168 = vperm.xlu0 %167, %v83
    %v169 = vpop.permute.xlu0 %168
    %172 = vset.pattern.permute.xlu0 0
    %173 = vperm.xlu0 %172, %v84
    %v174 = vpop.permute.xlu0 %173
    %v176 = vmul.f32 %v145, %v159
    %v177 = vmul.f32 %v148, %v164
    %v178 = vmul.f32 %v151, %v169
    %v179 = vmul.f32 %v154, %v174
    %vm180 = vcmp.eq.s32.totalorder %v69, 0
    %vm181 = vcmp.eq.s32.totalorder %v70, 0
    %vm182 = vcmp.eq.s32.totalorder %v71, 0
    %vm183 = vcmp.eq.s32.totalorder %v72, 0
    %v184 = vsel %vm180, 1, 0
    %v185 = vsel %vm181, 1, 0
    %v186 = vsel %vm182, 1, 0
    %v187 = vsel %vm183, 1, 0
    %v188 = vcvt.s32.f32 %v184
    %v189 = vcvt.s32.f32 %v185
    %v190 = vcvt.s32.f32 %v186
    %v191 = vcvt.s32.f32 %v187
    %v192 = vld [vmem:[%s5] sm:$0x1]
    %194 = vset.pattern.permute.xlu0 0
    %195 = vperm.xlu0 %194, %v188
    %v196 = vpop.permute.xlu0 %195
    %199 = vset.pattern.permute.xlu0 0
    %200 = vperm.xlu0 %199, %v189
    %v201 = vpop.permute.xlu0 %200
    %204 = vset.pattern.permute.xlu0 0
    %205 = vperm.xlu0 %204, %v190
    %v206 = vpop.permute.xlu0 %205
    %209 = vset.pattern.permute.xlu0 0
    %210 = vperm.xlu0 %209, %v191
    %v211 = vpop.permute.xlu0 %210
    %v213 = vperm.slane %v192, 0
    %v214 = vmul.f32 %v196, %v213
    %v215 = vmul.f32 %v201, %v213
    %v216 = vmul.f32 %v206, %v213
    %v217 = vmul.f32 %v211, %v213
    %v218 = vadd.f32 %v214, 0.0
    %v219 = vadd.f32 %v215, 0.0
    %v220 = vadd.f32 %v216, 0.0
    %v221 = vadd.f32 %v217, 0.0
    %vm222 = vcmp.eq.s32.totalorder %v69, 1
    %vm223 = vcmp.eq.s32.totalorder %v70, 1
    %vm224 = vcmp.eq.s32.totalorder %v71, 1
    %vm225 = vcmp.eq.s32.totalorder %v72, 1
    %v226 = vsel %vm222, 1, 0
    %v227 = vsel %vm223, 1, 0
    %v228 = vsel %vm224, 1, 0
    %v229 = vsel %vm225, 1, 0
    %v230 = vcvt.s32.f32 %v226
    %v231 = vcvt.s32.f32 %v227
    %v232 = vcvt.s32.f32 %v228
    %v233 = vcvt.s32.f32 %v229
    %v234 = vld [vmem:[%s5 + $0x1] sm:$0x1]
    %236 = vset.pattern.permute.xlu0 0
    %237 = vperm.xlu0 %236, %v230
    %v238 = vpop.permute.xlu0 %237
    %241 = vset.pattern.permute.xlu0 0
    %242 = vperm.xlu0 %241, %v231
    %v243 = vpop.permute.xlu0 %242
    %246 = vset.pattern.permute.xlu0 0
    %247 = vperm.xlu0 %246, %v232
    %v248 = vpop.permute.xlu0 %247
    %251 = vset.pattern.permute.xlu0 0
    %252 = vperm.xlu0 %251, %v233
    %v253 = vpop.permute.xlu0 %252
    %v255 = vperm.slane %v234, 0
    %v256 = vmul.f32 %v238, %v255
    %v257 = vmul.f32 %v243, %v255
    %v258 = vmul.f32 %v248, %v255
    %v259 = vmul.f32 %v253, %v255
    %v260 = vadd.f32 %v218, %v256
    %v261 = vadd.f32 %v219, %v257
    %v262 = vadd.f32 %v220, %v258
    %v263 = vadd.f32 %v221, %v259
    %vm264 = vcmp.eq.s32.totalorder %v69, 2
    %vm265 = vcmp.eq.s32.totalorder %v70, 2
    %vm266 = vcmp.eq.s32.totalorder %v71, 2
    %vm267 = vcmp.eq.s32.totalorder %v72, 2
    %v268 = vsel %vm264, 1, 0
    %v269 = vsel %vm265, 1, 0
    %v270 = vsel %vm266, 1, 0
    %v271 = vsel %vm267, 1, 0
    %v272 = vcvt.s32.f32 %v268
    %v273 = vcvt.s32.f32 %v269
    %v274 = vcvt.s32.f32 %v270
    %v275 = vcvt.s32.f32 %v271
    %v276 = vld [vmem:[%s5 + $0x2] sm:$0x1]
    %278 = vset.pattern.permute.xlu0 0
    %279 = vperm.xlu0 %278, %v272
    %v280 = vpop.permute.xlu0 %279
    %283 = vset.pattern.permute.xlu0 0
    %284 = vperm.xlu0 %283, %v273
    %v285 = vpop.permute.xlu0 %284
    %288 = vset.pattern.permute.xlu0 0
    %289 = vperm.xlu0 %288, %v274
    %v290 = vpop.permute.xlu0 %289
    %293 = vset.pattern.permute.xlu0 0
    %294 = vperm.xlu0 %293, %v275
    %v295 = vpop.permute.xlu0 %294
    %v297 = vperm.slane %v276, 0
    %v298 = vmul.f32 %v280, %v297
    %v299 = vmul.f32 %v285, %v297
    %v300 = vmul.f32 %v290, %v297
    %v301 = vmul.f32 %v295, %v297
    %v302 = vadd.f32 %v260, %v298
    %v303 = vadd.f32 %v261, %v299
    %v304 = vadd.f32 %v262, %v300
    %v305 = vadd.f32 %v263, %v301
    %vm306 = vcmp.eq.s32.totalorder %v69, 3
    %vm307 = vcmp.eq.s32.totalorder %v70, 3
    %vm308 = vcmp.eq.s32.totalorder %v71, 3
    %vm309 = vcmp.eq.s32.totalorder %v72, 3
    %v310 = vsel %vm306, 1, 0
    %v311 = vsel %vm307, 1, 0
    %v312 = vsel %vm308, 1, 0
    %v313 = vsel %vm309, 1, 0
    %v314 = vcvt.s32.f32 %v310
    %v315 = vcvt.s32.f32 %v311
    %v316 = vcvt.s32.f32 %v312
    %v317 = vcvt.s32.f32 %v313
    %v318 = vld [vmem:[%s5 + $0x3] sm:$0x1]
    %320 = vset.pattern.permute.xlu0 0
    %321 = vperm.xlu0 %320, %v314
    %v322 = vpop.permute.xlu0 %321
    %325 = vset.pattern.permute.xlu0 0
    %326 = vperm.xlu0 %325, %v315
    %v327 = vpop.permute.xlu0 %326
    %330 = vset.pattern.permute.xlu0 0
    %331 = vperm.xlu0 %330, %v316
    %v332 = vpop.permute.xlu0 %331
    %335 = vset.pattern.permute.xlu0 0
    %336 = vperm.xlu0 %335, %v317
    %v337 = vpop.permute.xlu0 %336
    %v339 = vperm.slane %v318, 0
    %v340 = vmul.f32 %v322, %v339
    %v341 = vmul.f32 %v327, %v339
    %v342 = vmul.f32 %v332, %v339
    %v343 = vmul.f32 %v337, %v339
    %v344 = vadd.f32 %v302, %v340
    %v345 = vadd.f32 %v303, %v341
    %v346 = vadd.f32 %v304, %v342
    %v347 = vadd.f32 %v305, %v343
    %vm348 = vcmp.eq.s32.totalorder %v73, 0
    %vm349 = vcmp.eq.s32.totalorder %v74, 0
    %vm350 = vcmp.eq.s32.totalorder %v75, 0
    %vm351 = vcmp.eq.s32.totalorder %v76, 0
    %v352 = vsel %vm348, 1, 0
    %v353 = vsel %vm349, 1, 0
    %v354 = vsel %vm350, 1, 0
    %v355 = vsel %vm351, 1, 0
    %v356 = vcvt.s32.f32 %v352
    %v357 = vcvt.s32.f32 %v353
    %v358 = vcvt.s32.f32 %v354
    %v359 = vcvt.s32.f32 %v355
    %v360 = vld [vmem:[%s6] sm:$0x1]
    %362 = vset.pattern.permute.xlu0 0
    %363 = vperm.xlu0 %362, %v356
    %v364 = vpop.permute.xlu0 %363
    %367 = vset.pattern.permute.xlu0 0
    %368 = vperm.xlu0 %367, %v357
    %v369 = vpop.permute.xlu0 %368
    %372 = vset.pattern.permute.xlu0 0
    %373 = vperm.xlu0 %372, %v358
    %v374 = vpop.permute.xlu0 %373
    %377 = vset.pattern.permute.xlu0 0
    %378 = vperm.xlu0 %377, %v359
    %v379 = vpop.permute.xlu0 %378
    %v381 = vperm.slane %v360, 0
    %v382 = vmul.f32 %v364, %v381
    %v383 = vmul.f32 %v369, %v381
    %v384 = vmul.f32 %v374, %v381
    %v385 = vmul.f32 %v379, %v381
    %v386 = vadd.f32 %v382, 0.0
    %v387 = vadd.f32 %v383, 0.0
    %v388 = vadd.f32 %v384, 0.0
    %v389 = vadd.f32 %v385, 0.0
    %vm390 = vcmp.eq.s32.totalorder %v73, 1
    %vm391 = vcmp.eq.s32.totalorder %v74, 1
    %vm392 = vcmp.eq.s32.totalorder %v75, 1
    %vm393 = vcmp.eq.s32.totalorder %v76, 1
    %v394 = vsel %vm390, 1, 0
    %v395 = vsel %vm391, 1, 0
    %v396 = vsel %vm392, 1, 0
    %v397 = vsel %vm393, 1, 0
    %v398 = vcvt.s32.f32 %v394
    %v399 = vcvt.s32.f32 %v395
    %v400 = vcvt.s32.f32 %v396
    %v401 = vcvt.s32.f32 %v397
    %v402 = vld [vmem:[%s6 + $0x1] sm:$0x1]
    %404 = vset.pattern.permute.xlu0 0
    %405 = vperm.xlu0 %404, %v398
    %v406 = vpop.permute.xlu0 %405
    %409 = vset.pattern.permute.xlu0 0
    %410 = vperm.xlu0 %409, %v399
    %v411 = vpop.permute.xlu0 %410
    %414 = vset.pattern.permute.xlu0 0
    %415 = vperm.xlu0 %414, %v400
    %v416 = vpop.permute.xlu0 %415
    %419 = vset.pattern.permute.xlu0 0
    %420 = vperm.xlu0 %419, %v401
    %v421 = vpop.permute.xlu0 %420
    %v423 = vperm.slane %v402, 0
    %v424 = vmul.f32 %v406, %v423
    %v425 = vmul.f32 %v411, %v423
    %v426 = vmul.f32 %v416, %v423
    %v427 = vmul.f32 %v421, %v423
    %v428 = vadd.f32 %v386, %v424
    %v429 = vadd.f32 %v387, %v425
    %v430 = vadd.f32 %v388, %v426
    %v431 = vadd.f32 %v389, %v427
    %vm432 = vcmp.eq.s32.totalorder %v73, 2
    %vm433 = vcmp.eq.s32.totalorder %v74, 2
    %vm434 = vcmp.eq.s32.totalorder %v75, 2
    %vm435 = vcmp.eq.s32.totalorder %v76, 2
    %v436 = vsel %vm432, 1, 0
    %v437 = vsel %vm433, 1, 0
    %v438 = vsel %vm434, 1, 0
    %v439 = vsel %vm435, 1, 0
    %v440 = vcvt.s32.f32 %v436
    %v441 = vcvt.s32.f32 %v437
    %v442 = vcvt.s32.f32 %v438
    %v443 = vcvt.s32.f32 %v439
    %v444 = vld [vmem:[%s6 + $0x2] sm:$0x1]
    %446 = vset.pattern.permute.xlu0 0
    %447 = vperm.xlu0 %446, %v440
    %v448 = vpop.permute.xlu0 %447
    %451 = vset.pattern.permute.xlu0 0
    %452 = vperm.xlu0 %451, %v441
    %v453 = vpop.permute.xlu0 %452
    %456 = vset.pattern.permute.xlu0 0
    %457 = vperm.xlu0 %456, %v442
    %v458 = vpop.permute.xlu0 %457
    %461 = vset.pattern.permute.xlu0 0
    %462 = vperm.xlu0 %461, %v443
    %v463 = vpop.permute.xlu0 %462
    %v465 = vperm.slane %v444, 0
    %v466 = vmul.f32 %v448, %v465
    %v467 = vmul.f32 %v453, %v465
    %v468 = vmul.f32 %v458, %v465
    %v469 = vmul.f32 %v463, %v465
    %v470 = vadd.f32 %v428, %v466
    %v471 = vadd.f32 %v429, %v467
    %v472 = vadd.f32 %v430, %v468
    %v473 = vadd.f32 %v431, %v469
    %vm474 = vcmp.eq.s32.totalorder %v73, 3
    %vm475 = vcmp.eq.s32.totalorder %v74, 3
    %vm476 = vcmp.eq.s32.totalorder %v75, 3
    %vm477 = vcmp.eq.s32.totalorder %v76, 3
    %v478 = vsel %vm474, 1, 0
    %v479 = vsel %vm475, 1, 0
    %v480 = vsel %vm476, 1, 0
    %v481 = vsel %vm477, 1, 0
    %v482 = vcvt.s32.f32 %v478
    %v483 = vcvt.s32.f32 %v479
    %v484 = vcvt.s32.f32 %v480
    %v485 = vcvt.s32.f32 %v481
    %v486 = vld [vmem:[%s6 + $0x3] sm:$0x1]
    %488 = vset.pattern.permute.xlu0 0
    %489 = vperm.xlu0 %488, %v482
    %v490 = vpop.permute.xlu0 %489
    %493 = vset.pattern.permute.xlu0 0
    %494 = vperm.xlu0 %493, %v483
    %v495 = vpop.permute.xlu0 %494
    %498 = vset.pattern.permute.xlu0 0
    %499 = vperm.xlu0 %498, %v484
    %v500 = vpop.permute.xlu0 %499
    %503 = vset.pattern.permute.xlu0 0
    %504 = vperm.xlu0 %503, %v485
    %v505 = vpop.permute.xlu0 %504
    %v507 = vperm.slane %v486, 0
    %v508 = vmul.f32 %v490, %v507
    %v509 = vmul.f32 %v495, %v507
    %v510 = vmul.f32 %v500, %v507
    %v511 = vmul.f32 %v505, %v507
    %v512 = vadd.f32 %v470, %v508
    %v513 = vadd.f32 %v471, %v509
    %v514 = vadd.f32 %v472, %v510
    %v515 = vadd.f32 %v473, %v511
    %v516 = vmul.f32 %v344, %v344
    %v517 = vmul.f32 %v345, %v345
    %vm518 = vcmask 130048
    %v519 = vsel %vm518, %v516, 0.0
    %v520 = vsel %vm518, %v517, 0.0
    %v521 = vadd.f32 %v519, %v520
    %v522 = vrot.slane %v521, 4
    %v523 = vadd.f32 %v521, %v522
    %v524 = vrot.slane %v523, 2
    %v525 = vadd.f32 %v523, %v524
    %v526 = vrot.slane %v525, 1
    %v527 = vadd.f32 %v525, %v526
    %v528 = vmax.f32 %v527, 1e-24
    %v529 = vrsqrt.pop %v528
    %v530 = vmul.f32 %v529, %v528
    %v531 = vmul.f32 %v530, %v529
    %v532 = vmul.f32 0.5, %v531
    %v533 = vsub.f32 1.5, %v532
    %v534 = vmul.f32 %v529, %v533
    %vm535 = vweird.f32 %v528
    %vm536 = vweird.f32 %v529
    %vm537 = vmor %vm535, %vm536
    %v538 = vsel %vm537, %v529, %v534
    %v539 = vmul.f32 %v344, %v538
    %v540 = vmul.f32 %v345, %v538
    %v541 = vmul.f32 %v346, %v346
    %v542 = vmul.f32 %v347, %v347
    %v543 = vsel %vm518, %v541, 0.0
    %v544 = vsel %vm518, %v542, 0.0
    %v545 = vadd.f32 %v543, %v544
    %v546 = vrot.slane %v545, 4
    %v547 = vadd.f32 %v545, %v546
    %v548 = vrot.slane %v547, 2
    %v549 = vadd.f32 %v547, %v548
    %v550 = vrot.slane %v549, 1
    %v551 = vadd.f32 %v549, %v550
    %v552 = vmax.f32 %v551, 1e-24
    %v553 = vrsqrt.pop %v552
    %v554 = vmul.f32 %v553, %v552
    %v555 = vmul.f32 %v554, %v553
    %v556 = vmul.f32 0.5, %v555
    %v557 = vsub.f32 1.5, %v556
    %v558 = vmul.f32 %v553, %v557
    %vm559 = vweird.f32 %v552
    %vm560 = vweird.f32 %v553
    %vm561 = vmor %vm559, %vm560
    %v562 = vsel %vm561, %v553, %v558
    %v563 = vmul.f32 %v346, %v562
    %v564 = vmul.f32 %v347, %v562
    %569 = vrot.lane.b32.xlu0 %v512, 16
    %v570 = vpop.permute.xlu0 %569
    %571 = vrot.lane.b32.xlu0 %v513, 16
    %v572 = vpop.permute.xlu0 %571
    %573 = vrot.lane.b32.xlu0 %v514, 16
    %v574 = vpop.permute.xlu0 %573
    %575 = vrot.lane.b32.xlu0 %v515, 16
    %v576 = vpop.permute.xlu0 %575
    %v581 = vsel %vm518, %v539, %v570
    %v582 = vsel %vm518, %v540, %v572
    %v583 = vsel %vm518, %v563, %v574
    %v584 = vsel %vm518, %v564, %v576
    %v585 = vmul.f32 %v581, %v159
    %v586 = vmul.f32 %v582, %v164
    %v587 = vmul.f32 %v583, %v169
    %v588 = vmul.f32 %v584, %v174
    %vm589 = vcmask 195584
    %590 = vst.msk [vmem:[#allocation2] sm:$0xff] %vm589, %v585
    %591 = vst.msk [vmem:[#allocation2 + $0x8] sm:$0xff] %vm589, %v586
    %592 = vst.msk [vmem:[#allocation2 + $0x10] sm:$0xff] %vm589, %v587
    %593 = vst.msk [vmem:[#allocation2 + $0x18] sm:$0xff] %vm589, %v588
    %v594 = vld [vmem:[%s7] sm:$0xff]
    %v595 = vld [vmem:[%s7 + $0x8] sm:$0xff]
    %v596 = vld [vmem:[%s7 + $0x10] sm:$0xff]
    %v597 = vld [vmem:[%s7 + $0x18] sm:$0xff]
    %v598 = vld [vmem:[%s8] sm:$0x1]
    %v600 = vperm.slane %v598, 0
    %vm602 = vcmask 261120
    %v604 = vsel %vm602, %v176, 0
    %v607 = vsel %vm602, %v177, 0
    %v610 = vsel %vm602, %v178, 0
    %v613 = vsel %vm602, %v179, 0
    %615 = vmatpush.msra.mxu0 0.0
    %616 = vmatpush.msra.mxu0 0.0
    %617 = vmatpush.msra.mxu0 0.0
    %618 = vmatpush.msra.mxu0 0.0
    %619 = vmatpush.msra.mxu0 0.0
    %620 = vmatpush.msra.mxu0 0.0
    %621 = vmatpush.msra.mxu0 0.0
    %622 = vmatpush.msra.mxu0 0.0
    %623 = vmatpush.msra.mxu0 0.0
    %624 = vmatpush.msra.mxu0 0.0
    %625 = vmatpush.msra.mxu0 0.0
    %626 = vmatpush.msra.mxu0 0.0
    %627 = vmatpush.msra.mxu0 %v597
    %628 = vmatpush.msra.mxu0 %v596
    %629 = vmatpush.msra.mxu0 %v595
    %630 = vmatpush.msra.mxu0 %v594
    %631 = vmatmul.f32.gmra.mxu0 %v604
    %v632 = vpop.f32.mrf.mxu0
    %v633 = vadd.f32 %v600, %v632
    %634 = vmatmul.f32.gmra.mxu0 %v607
    %v635 = vpop.f32.mrf.mxu0
    %v636 = vadd.f32 %v600, %v635
    %637 = vmatmul.f32.gmra.mxu0 %v610
    %v638 = vpop.f32.mrf.mxu0
    %v639 = vadd.f32 %v600, %v638
    %640 = vmatmul.f32.gmra.mxu0 %v613
    %v641 = vpop.f32.mrf.mxu0
    %v642 = vadd.f32 %v600, %v641
    %643 = vdwg.mxu0
    %v644 = vld [vmem:[%s9] sm:$0xff]
    %v645 = vld [vmem:[%s9 + $0x8] sm:$0xff]
    %v646 = vld [vmem:[%s9 + $0x10] sm:$0xff]
    %v647 = vld [vmem:[%s9 + $0x18] sm:$0xff]
    %v648 = vld [vmem:[%s10] sm:$0x1]
    %v650 = vperm.slane %v648, 0
    %v653 = vsel %vm602, %v633, 0
    %v656 = vsel %vm602, %v636, 0
    %v659 = vsel %vm602, %v639, 0
    %v662 = vsel %vm602, %v642, 0
    %664 = vmatpush.msra.mxu0 0.0
    %665 = vmatpush.msra.mxu0 0.0
    %666 = vmatpush.msra.mxu0 0.0
    %667 = vmatpush.msra.mxu0 0.0
    %668 = vmatpush.msra.mxu0 0.0
    %669 = vmatpush.msra.mxu0 0.0
    %670 = vmatpush.msra.mxu0 0.0
    %671 = vmatpush.msra.mxu0 0.0
    %672 = vmatpush.msra.mxu0 0.0
    %673 = vmatpush.msra.mxu0 0.0
    %674 = vmatpush.msra.mxu0 0.0
    %675 = vmatpush.msra.mxu0 0.0
    %676 = vmatpush.msra.mxu0 %v647
    %677 = vmatpush.msra.mxu0 %v646
    %678 = vmatpush.msra.mxu0 %v645
    %679 = vmatpush.msra.mxu0 %v644
    %680 = vmatmul.f32.gmra.mxu0 %v653
    %v681 = vpop.f32.mrf.mxu0
    %v682 = vadd.f32 %v650, %v681
    %683 = vmatmul.f32.gmra.mxu0 %v656
    %v684 = vpop.f32.mrf.mxu0
    %v685 = vadd.f32 %v650, %v684
    %686 = vmatmul.f32.gmra.mxu0 %v659
    %v687 = vpop.f32.mrf.mxu0
    %v688 = vadd.f32 %v650, %v687
    %689 = vmatmul.f32.gmra.mxu0 %v662
    %v690 = vpop.f32.mrf.mxu0
    %v691 = vadd.f32 %v650, %v690
    %692 = vdwg.mxu0
    %vm693 = vcmask 7168
    %v694 = vsel %vm693, %v81, 0.0
    %v695 = vsel %vm693, %v82, 0.0
    %v696 = vadd.f32 %v694, %v695
    %v697 = vrot.slane %v696, 4
    %v698 = vadd.f32 %v696, %v697
    %v699 = vrot.slane %v698, 2
    %v700 = vadd.f32 %v698, %v699
    %v701 = vrot.slane %v700, 1
    %v702 = vadd.f32 %v700, %v701
    %v703 = vsel %vm518, %v682, 0.0
    %v704 = vsel %vm518, %v685, 0.0
    %v705 = vadd.f32 %v703, %v704
    %v706 = vrot.slane %v705, 4
    %v707 = vadd.f32 %v705, %v706
    %v708 = vrot.slane %v707, 2
    %v709 = vadd.f32 %v707, %v708
    %v710 = vrot.slane %v709, 1
    %v711 = vadd.f32 %v709, %v710
    %v712 = vrcp.pop %v702
    %714 = vset.pattern.permute.xlu0 0
    %715 = vperm.xlu0 %714, %v712
    %v716 = vpop.permute.xlu0 %715
    %v718 = vmul.f32 %v711, %v716
    %v719 = vsel %vm693, %v83, 0.0
    %v720 = vsel %vm693, %v84, 0.0
    %v721 = vadd.f32 %v719, %v720
    %v722 = vrot.slane %v721, 4
    %v723 = vadd.f32 %v721, %v722
    %v724 = vrot.slane %v723, 2
    %v725 = vadd.f32 %v723, %v724
    %v726 = vrot.slane %v725, 1
    %v727 = vadd.f32 %v725, %v726
    %v728 = vsel %vm518, %v688, 0.0
    %v729 = vsel %vm518, %v691, 0.0
    %v730 = vadd.f32 %v728, %v729
    %v731 = vrot.slane %v730, 4
    %v732 = vadd.f32 %v730, %v731
    %v733 = vrot.slane %v732, 2
    %v734 = vadd.f32 %v732, %v733
    %v735 = vrot.slane %v734, 1
    %v736 = vadd.f32 %v734, %v735
    %v737 = vrcp.pop %v727
    %739 = vset.pattern.permute.xlu0 0
    %740 = vperm.xlu0 %739, %v737
    %v741 = vpop.permute.xlu0 %740
    %v743 = vmul.f32 %v736, %v741
    %vm744 = vcmask 1040384
    %v745 = vsel %vm744, %v718, %v743
    %vm746 = vcmask 123904
    %v747 = vsel %vm746, %v745, 0.0
    %748 = vadd.xlane.f32.xlu0 %v747
    %v749 = vpop.xlane.xlu0 %748
    %v750 = vrcp.pop 16.0
    %v751 = vmul.f32 16.0, %v750
    %v752 = vsub.f32 1.0, %v751
    %v753 = vmul.f32 %v750, %v752
    %v754 = vadd.f32 %v750, %v753
    %vm755 = vweird.f32 %v750
    %v756 = vsel %vm755, %v750, %v754
    %v757 = vmul.f32 %v749, %v756
    %v758 = vsub.f32 %v745, %v757
    %v759 = vmul.f32 %v758, %v758
    %v760 = vsel %vm746, %v759, 0.0
    %761 = vadd.xlane.f32.xlu0 %v760
    %v762 = vpop.xlane.xlu0 %761
    %v763 = vmul.f32 %v762, %v756
    %v764 = vadd.f32 %v763, 1e-05
    %v765 = vrsqrt.pop %v764
    %v766 = vmul.f32 %v765, %v764
    %v767 = vmul.f32 %v766, %v765
    %v768 = vmul.f32 0.5, %v767
    %v769 = vsub.f32 1.5, %v768
    %v770 = vmul.f32 %v765, %v769
    %vm771 = vweird.f32 %v764
    %vm772 = vweird.f32 %v765
    %vm773 = vmor %vm771, %vm772
    %v774 = vsel %vm773, %v765, %v770
    %v775 = vmul.f32 %v758, %v774
    %780 = vrot.lane.b32.xlu0 %v682, 112
    %v781 = vpop.permute.xlu0 %780
    %782 = vrot.lane.b32.xlu0 %v685, 112
    %v783 = vpop.permute.xlu0 %782
    %784 = vrot.lane.b32.xlu0 %v688, 112
    %v785 = vpop.permute.xlu0 %784
    %786 = vrot.lane.b32.xlu0 %v691, 112
    %v787 = vpop.permute.xlu0 %786
    %vm792 = vcmask 64512
    %v793 = vsel %vm792, %v781, 0.0
    %794 = vadd.xlane.f32.xlu0 %v793
    %v795 = vpop.xlane.xlu0 %794
    %v796 = vsel %vm792, %v783, 0.0
    %797 = vadd.xlane.f32.xlu0 %v796
    %v798 = vpop.xlane.xlu0 %797
    %v799 = vsel %vm792, %v785, 0.0
    %800 = vadd.xlane.f32.xlu0 %v799
    %v801 = vpop.xlane.xlu0 %800
    %v802 = vsel %vm792, %v787, 0.0
    %803 = vadd.xlane.f32.xlu0 %v802
    %v804 = vpop.xlane.xlu0 %803
    %v805 = vrcp.pop 8.0
    %v806 = vmul.f32 8.0, %v805
    %v807 = vsub.f32 1.0, %v806
    %v808 = vmul.f32 %v805, %v807
    %v809 = vadd.f32 %v805, %v808
    %vm810 = vweird.f32 %v805
    %v811 = vsel %vm810, %v805, %v809
    %v812 = vmul.f32 %v795, %v811
    %v813 = vmul.f32 %v798, %v811
    %v814 = vmul.f32 %v801, %v811
    %v815 = vmul.f32 %v804, %v811
    %v816 = vsub.f32 %v682, %v812
    %v817 = vsub.f32 %v685, %v813
    %v818 = vsub.f32 %v688, %v814
    %v819 = vsub.f32 %v691, %v815
    %v820 = vmul.f32 %v816, %v816
    %v821 = vmul.f32 %v817, %v817
    %v822 = vmul.f32 %v818, %v818
    %v823 = vmul.f32 %v819, %v819
    %828 = vrot.lane.b32.xlu0 %v820, 112
    %v829 = vpop.permute.xlu0 %828
    %830 = vrot.lane.b32.xlu0 %v821, 112
    %v831 = vpop.permute.xlu0 %830
    %832 = vrot.lane.b32.xlu0 %v822, 112
    %v833 = vpop.permute.xlu0 %832
    %834 = vrot.lane.b32.xlu0 %v823, 112
    %v835 = vpop.permute.xlu0 %834
    %v840 = vsel %vm792, %v829, 0.0
    %841 = vadd.xlane.f32.xlu0 %v840
    %v842 = vpop.xlane.xlu0 %841
    %v843 = vsel %vm792, %v831, 0.0
    %844 = vadd.xlane.f32.xlu0 %v843
    %v845 = vpop.xlane.xlu0 %844
    %v846 = vsel %vm792, %v833, 0.0
    %847 = vadd.xlane.f32.xlu0 %v846
    %v848 = vpop.xlane.xlu0 %847
    %v849 = vsel %vm792, %v835, 0.0
    %850 = vadd.xlane.f32.xlu0 %v849
    %v851 = vpop.xlane.xlu0 %850
    %v852 = vmul.f32 %v842, %v811
    %v853 = vmul.f32 %v845, %v811
    %v854 = vmul.f32 %v848, %v811
    %v855 = vmul.f32 %v851, %v811
    %v856 = vadd.f32 %v852, 1e-05
    %v857 = vadd.f32 %v853, 1e-05
    %v858 = vadd.f32 %v854, 1e-05
    %v859 = vadd.f32 %v855, 1e-05
    %v860 = vrsqrt.pop %v856
    %v861 = vmul.f32 %v860, %v856
    %v862 = vmul.f32 %v861, %v860
    %v863 = vmul.f32 0.5, %v862
    %v864 = vsub.f32 1.5, %v863
    %v865 = vmul.f32 %v860, %v864
    %vm866 = vweird.f32 %v856
    %vm867 = vweird.f32 %v860
    %vm868 = vmor %vm866, %vm867
    %v869 = vsel %vm868, %v860, %v865
    %v870 = vrsqrt.pop %v857
    %v871 = vmul.f32 %v870, %v857
    %v872 = vmul.f32 %v871, %v870
    %v873 = vmul.f32 0.5, %v872
    %v874 = vsub.f32 1.5, %v873
    %v875 = vmul.f32 %v870, %v874
    %vm876 = vweird.f32 %v857
    %vm877 = vweird.f32 %v870
    %vm878 = vmor %vm876, %vm877
    %v879 = vsel %vm878, %v870, %v875
    %v880 = vrsqrt.pop %v858
    %v881 = vmul.f32 %v880, %v858
    %v882 = vmul.f32 %v881, %v880
    %v883 = vmul.f32 0.5, %v882
    %v884 = vsub.f32 1.5, %v883
    %v885 = vmul.f32 %v880, %v884
    %vm886 = vweird.f32 %v858
    %vm887 = vweird.f32 %v880
    %vm888 = vmor %vm886, %vm887
    %v889 = vsel %vm888, %v880, %v885
    %v890 = vrsqrt.pop %v859
    %v891 = vmul.f32 %v890, %v859
    %v892 = vmul.f32 %v891, %v890
    %v893 = vmul.f32 0.5, %v892
    %v894 = vsub.f32 1.5, %v893
    %v895 = vmul.f32 %v890, %v894
    %vm896 = vweird.f32 %v859
    %vm897 = vweird.f32 %v890
    %vm898 = vmor %vm896, %vm897
    %v899 = vsel %vm898, %v890, %v895
    %v900 = vmul.f32 %v816, %v869
    %v901 = vmul.f32 %v817, %v879
    %v902 = vmul.f32 %v818, %v889
    %v903 = vmul.f32 %v819, %v899
    %v904 = vld [vmem:[%s11] sm:$0xff]
    %v905 = vld [vmem:[%s11 + $0x8] sm:$0xff]
    %v906 = vld [vmem:[%s12] sm:$0x1]
    %v908 = vperm.slane %v906, 0
    %v911 = vsel %vm518, %v775, 0
    %913 = vmatpush.msra.mxu0 0.0
    %914 = vmatpush.msra.mxu0 0.0
    %915 = vmatpush.msra.mxu0 0.0
    %916 = vmatpush.msra.mxu0 0.0
    %917 = vmatpush.msra.mxu0 0.0
    %918 = vmatpush.msra.mxu0 0.0
    %919 = vmatpush.msra.mxu0 0.0
    %920 = vmatpush.msra.mxu0 0.0
    %921 = vmatpush.msra.mxu0 0.0
    %922 = vmatpush.msra.mxu0 0.0
    %923 = vmatpush.msra.mxu0 0.0
    %924 = vmatpush.msra.mxu0 0.0
    %925 = vmatpush.msra.mxu0 0.0
    %926 = vmatpush.msra.mxu0 0.0
    %927 = vmatpush.msra.mxu0 %v905
    %928 = vmatpush.msra.mxu0 %v904
    %929 = vmatmul.f32.gmra.mxu0 %v911
    %v930 = vpop.f32.mrf.mxu0
    %v931 = vadd.f32 %v908, %v930
    %932 = vdwg.mxu0
    %v933 = vperm.slane %v931, 0
    %v934 = vperm.slane %v931, 1
    %v935 = vld [vmem:[%s13] sm:$0xff]
    %v936 = vld [vmem:[%s14] sm:$0x1]
    %v938 = vperm.slane %v936, 0
    %944 = vrot.lane.b32.xlu0 %v900, 112
    %v945 = vpop.permute.xlu0 %944
    %946 = vrot.lane.b32.xlu0 %v901, 112
    %v947 = vpop.permute.xlu0 %946
    %948 = vrot.lane.b32.xlu0 %v902, 112
    %v949 = vpop.permute.xlu0 %948
    %950 = vrot.lane.b32.xlu0 %v903, 112
    %v951 = vpop.permute.xlu0 %950
    %v952 = vsel %vm792, %v945, 0
    %v954 = vsel %vm792, %v947, 0
    %v956 = vsel %vm792, %v949, 0
    %v958 = vsel %vm792, %v951, 0
    %960 = vmatpush.msra.mxu0 0.0
    %961 = vmatpush.msra.mxu0 0.0
    %962 = vmatpush.msra.mxu0 0.0
    %963 = vmatpush.msra.mxu0 0.0
    %964 = vmatpush.msra.mxu0 0.0
    %965 = vmatpush.msra.mxu0 0.0
    %966 = vmatpush.msra.mxu0 0.0
    %967 = vmatpush.msra.mxu0 0.0
    %968 = vmatpush.msra.mxu0 0.0
    %969 = vmatpush.msra.mxu0 0.0
    %970 = vmatpush.msra.mxu0 0.0
    %971 = vmatpush.msra.mxu0 0.0
    %972 = vmatpush.msra.mxu0 0.0
    %973 = vmatpush.msra.mxu0 0.0
    %974 = vmatpush.msra.mxu0 0.0
    %975 = vmatpush.msra.mxu0 %v935
    %976 = vmatmul.f32.gmra.mxu0 %v952
    %v977 = vpop.f32.mrf.mxu0
    %v978 = vadd.f32 %v938, %v977
    %979 = vmatmul.f32.gmra.mxu0 %v954
    %v980 = vpop.f32.mrf.mxu0
    %v981 = vadd.f32 %v938, %v980
    %982 = vmatmul.f32.gmra.mxu0 %v956
    %v983 = vpop.f32.mrf.mxu0
    %v984 = vadd.f32 %v938, %v983
    %985 = vmatmul.f32.gmra.mxu0 %v958
    %v986 = vpop.f32.mrf.mxu0
    %v987 = vadd.f32 %v938, %v986
    %988 = vdwg.mxu0
    %v989 = vadd.f32 %v633, %v933
    %v990 = vadd.f32 %v636, %v933
    %v991 = vadd.f32 %v639, %v934
    %v992 = vadd.f32 %v642, %v934
    %v993 = vadd.f32 %v989, %v978
    %v994 = vadd.f32 %v990, %v981
    %v995 = vadd.f32 %v991, %v984
    %v996 = vadd.f32 %v992, %v987
    %v997 = vld [vmem:[%s15] sm:$0xff]
    %v998 = vld [vmem:[%s15 + $0x8] sm:$0xff]
    %v999 = vld [vmem:[%s15 + $0x10] sm:$0xff]
    %v1000 = vld [vmem:[%s15 + $0x18] sm:$0xff]
    %v1001 = vld [vmem:[%s16] sm:$0x1]
    %v1003 = vperm.slane %v1001, 0
    %v1006 = vsel %vm602, %v993, 0
    %v1009 = vsel %vm602, %v994, 0
    %v1012 = vsel %vm602, %v995, 0
    %v1015 = vsel %vm602, %v996, 0
    %1017 = vmatpush.msra.mxu0 0.0
    %1018 = vmatpush.msra.mxu0 0.0
    %1019 = vmatpush.msra.mxu0 0.0
    %1020 = vmatpush.msra.mxu0 0.0
    %1021 = vmatpush.msra.mxu0 0.0
    %1022 = vmatpush.msra.mxu0 0.0
    %1023 = vmatpush.msra.mxu0 0.0
    %1024 = vmatpush.msra.mxu0 0.0
    %1025 = vmatpush.msra.mxu0 0.0
    %1026 = vmatpush.msra.mxu0 0.0
    %1027 = vmatpush.msra.mxu0 0.0
    %1028 = vmatpush.msra.mxu0 0.0
    %1029 = vmatpush.msra.mxu0 %v1000
    %1030 = vmatpush.msra.mxu0 %v999
    %1031 = vmatpush.msra.mxu0 %v998
    %1032 = vmatpush.msra.mxu0 %v997
    %1033 = vmatmul.f32.gmra.mxu0 %v1006
    %v1034 = vpop.f32.mrf.mxu0
    %v1035 = vadd.f32 %v1003, %v1034
    %1036 = vmatmul.f32.gmra.mxu0 %v1009
    %v1037 = vpop.f32.mrf.mxu0
    %v1038 = vadd.f32 %v1003, %v1037
    %1039 = vmatmul.f32.gmra.mxu0 %v1012
    %v1040 = vpop.f32.mrf.mxu0
    %v1041 = vadd.f32 %v1003, %v1040
    %1042 = vmatmul.f32.gmra.mxu0 %v1015
    %v1043 = vpop.f32.mrf.mxu0
    %v1044 = vadd.f32 %v1003, %v1043
    %1045 = vdwg.mxu0
    %v1046 = vld [vmem:[%s17] sm:$0xff]
    %v1047 = vld [vmem:[%s17 + $0x8] sm:$0xff]
    %v1048 = vld [vmem:[%s17 + $0x10] sm:$0xff]
    %v1049 = vld [vmem:[%s17 + $0x18] sm:$0xff]
    %v1050 = vld [vmem:[%s18] sm:$0x1]
    %v1052 = vperm.slane %v1050, 0
    %v1055 = vsel %vm602, %v1035, 0
    %v1058 = vsel %vm602, %v1038, 0
    %v1061 = vsel %vm602, %v1041, 0
    %v1064 = vsel %vm602, %v1044, 0
    %1066 = vmatpush.msra.mxu0 0.0
    %1067 = vmatpush.msra.mxu0 0.0
    %1068 = vmatpush.msra.mxu0 0.0
    %1069 = vmatpush.msra.mxu0 0.0
    %1070 = vmatpush.msra.mxu0 0.0
    %1071 = vmatpush.msra.mxu0 0.0
    %1072 = vmatpush.msra.mxu0 0.0
    %1073 = vmatpush.msra.mxu0 0.0
    %1074 = vmatpush.msra.mxu0 0.0
    %1075 = vmatpush.msra.mxu0 0.0
    %1076 = vmatpush.msra.mxu0 0.0
    %1077 = vmatpush.msra.mxu0 0.0
    %1078 = vmatpush.msra.mxu0 %v1049
    %1079 = vmatpush.msra.mxu0 %v1048
    %1080 = vmatpush.msra.mxu0 %v1047
    %1081 = vmatpush.msra.mxu0 %v1046
    %1082 = vmatmul.f32.gmra.mxu0 %v1055
    %v1083 = vpop.f32.mrf.mxu0
    %v1084 = vadd.f32 %v1052, %v1083
    %1085 = vmatmul.f32.gmra.mxu0 %v1058
    %v1086 = vpop.f32.mrf.mxu0
    %v1087 = vadd.f32 %v1052, %v1086
    %1088 = vmatmul.f32.gmra.mxu0 %v1061
    %v1089 = vpop.f32.mrf.mxu0
    %v1090 = vadd.f32 %v1052, %v1089
    %1091 = vmatmul.f32.gmra.mxu0 %v1064
    %v1092 = vpop.f32.mrf.mxu0
    %v1093 = vadd.f32 %v1052, %v1092
    %1094 = vdwg.mxu0
    %1095 = vxpose.xlu0.b32.start [1/16] %v1084, 128
    %1096 = vxpose.xlu0.b32.cont [2/16] %v1087, 128
    %1097 = vxpose.xlu0.b32.cont [3/16] 0.0, 128
    %1098 = vxpose.xlu0.b32.cont [4/16] 0.0, 128
    %1099 = vxpose.xlu0.b32.cont [5/16] 0.0, 128
    %1100 = vxpose.xlu0.b32.cont [6/16] 0.0, 128
    %1101 = vxpose.xlu0.b32.cont [7/16] 0.0, 128
    %1102 = vxpose.xlu0.b32.cont [8/16] 0.0, 128
    %1103 = vxpose.xlu0.b32.cont [9/16] 0.0, 128
    %1104 = vxpose.xlu0.b32.cont [10/16] 0.0, 128
    %1105 = vxpose.xlu0.b32.cont [11/16] 0.0, 128
    %1106 = vxpose.xlu0.b32.cont [12/16] 0.0, 128
    %1107 = vxpose.xlu0.b32.cont [13/16] 0.0, 128
    %1108 = vxpose.xlu0.b32.cont [14/16] 0.0, 128
    %1109 = vxpose.xlu0.b32.cont [15/16] 0.0, 128
    %1110 = vxpose.xlu0.b32.end [16/16] 0.0, 128
    %v1111 = vpop.trf.xlu0
    %v1112 = vpop.trf.xlu0
    %v1113 = vpop.trf.xlu0
    %v1114 = vpop.trf.xlu0
    %v1115 = vpop.trf.xlu0
    %v1116 = vpop.trf.xlu0
    %v1117 = vpop.trf.xlu0
    %v1118 = vpop.trf.xlu0
    %v1119 = vpop.trf.xlu0
    %v1120 = vpop.trf.xlu0
    %v1121 = vpop.trf.xlu0
    %v1122 = vpop.trf.xlu0
    %v1123 = vpop.trf.xlu0
    %v1124 = vpop.trf.xlu0
    %v1125 = vpop.trf.xlu0
    %v1126 = vpop.trf.xlu0
    %1127 = vst.msk [vmem:[%s19] sm:$0xff] %vm518, %v1111
    %1128 = vst.msk [vmem:[%s19 + $0x8] sm:$0xff] %vm518, %v1112
    %1129 = vst.msk [vmem:[%s19 + $0x10] sm:$0xff] %vm518, %v1113
    %1130 = vxpose.xlu0.b32.start [1/16] %v1090, 128
    %1131 = vxpose.xlu0.b32.cont [2/16] %v1093, 128
    %1132 = vxpose.xlu0.b32.cont [3/16] 0.0, 128
    %1133 = vxpose.xlu0.b32.cont [4/16] 0.0, 128
    %1134 = vxpose.xlu0.b32.cont [5/16] 0.0, 128
    %1135 = vxpose.xlu0.b32.cont [6/16] 0.0, 128
    %1136 = vxpose.xlu0.b32.cont [7/16] 0.0, 128
    %1137 = vxpose.xlu0.b32.cont [8/16] 0.0, 128
    %1138 = vxpose.xlu0.b32.cont [9/16] 0.0, 128
    %1139 = vxpose.xlu0.b32.cont [10/16] 0.0, 128
    %1140 = vxpose.xlu0.b32.cont [11/16] 0.0, 128
    %1141 = vxpose.xlu0.b32.cont [12/16] 0.0, 128
    %1142 = vxpose.xlu0.b32.cont [13/16] 0.0, 128
    %1143 = vxpose.xlu0.b32.cont [14/16] 0.0, 128
    %1144 = vxpose.xlu0.b32.cont [15/16] 0.0, 128
    %1145 = vxpose.xlu0.b32.end [16/16] 0.0, 128
    %v1146 = vpop.trf.xlu0
    %v1147 = vpop.trf.xlu0
    %v1148 = vpop.trf.xlu0
    %v1149 = vpop.trf.xlu0
    %v1150 = vpop.trf.xlu0
    %v1151 = vpop.trf.xlu0
    %v1152 = vpop.trf.xlu0
    %v1153 = vpop.trf.xlu0
    %v1154 = vpop.trf.xlu0
    %v1155 = vpop.trf.xlu0
    %v1156 = vpop.trf.xlu0
    %v1157 = vpop.trf.xlu0
    %v1158 = vpop.trf.xlu0
    %v1159 = vpop.trf.xlu0
    %v1160 = vpop.trf.xlu0
    %v1161 = vpop.trf.xlu0
    %s1162 = scalar_lea.vmem %s19, 24
    %1163 = vst.msk [vmem:[%s1162] sm:$0xff] %vm518, %v1146
    %1164 = vst.msk [vmem:[%s1162 + $0x8] sm:$0xff] %vm518, %v1147
    %1165 = vst.msk [vmem:[%s1162 + $0x10] sm:$0xff] %vm518, %v1148
    // Predicated region
    $region78: #{acoustic_model_forward.1} parent=1 // pred_check
      _
    $region79: #{acoustic_model_forward.1} parent=1 // pred_check_branch
      %1167 = sbr.rel (0) target = $region81
    $region80: #{acoustic_model_forward.1} parent=1 // pred_region
      _
    $region81: #{acoustic_model_forward.1} parent=1 // pred_fallthru
      _
    // Predicated region
    $region82: #{acoustic_model_forward.1} parent=1 // pred_check
      _
    $region83: #{acoustic_model_forward.1} parent=1 // pred_check_branch
      %1169 = sbr.rel (0) target = $region85
    $region84: #{acoustic_model_forward.1} parent=1 // pred_region
      %1171 = vsyncadd [#allocation3], 0
      %s1172 = sshll.u32 [#allocation2], 4
      %s1173 = int_to_ptr.vmem [resolvable:$true] %s1172
      %s1174 = sshll.u32 %s20, 4
      %s1175 = int_to_ptr.hbm [resolvable:$true] %s1174
      %1180 = dma.vmem_to_hbm [thread:$0]  %s1173, 512, %s1175, [#allocation3], 128, 128, 8
    $region85: #{acoustic_model_forward.1} parent=1 // pred_fallthru
      _
    // Predicated region
    $region86: #{acoustic_model_forward.1} parent=1 // pred_check
      _
    $region87: #{acoustic_model_forward.1} parent=1 // pred_check_branch
      %1182 = sbr.rel (0) target = $region89
    $region88: #{acoustic_model_forward.1} parent=1 // pred_region
      _
    $region89: #{acoustic_model_forward.1} parent=1 // pred_fallthru
      _
    // Predicated region
    $region90: #{acoustic_model_forward.1} parent=1 // pred_check
      _
    $region91: #{acoustic_model_forward.1} parent=1 // pred_check_branch
      %1184 = sbr.rel (0) target = $region93
    $region92: #{acoustic_model_forward.1} parent=1 // pred_region
      %1186 = dma.done [#allocation3], 512
    $region93: #{acoustic_model_forward.1} parent=1 // pred_fallthru
      _
    %1187 = vsyncpa [#allocation3], 1

</llo_original>
